<compile_context>
chip_gen: v7x
topology: tpu7x:2x2x1
jax: 0.10.0
libtpu: 0.0.40
codegen_flags: <defaults>
</compile_context>

<pallas_src>
import functools

import jax
import jax.numpy as jnp
from jax.experimental import pallas as pl
from jax.experimental.pallas import tpu as pltpu


# ----------------------------------------------------------------------------
# VMEM limit: generation-aware (v7x has only 64 MiB / TensorCore), safe fallback.
# ----------------------------------------------------------------------------
def _default_vmem_limit():
    try:
        cap = int(pltpu.get_tpu_info().vmem_capacity_bytes)
        return max(32 * 1024 * 1024, min(96 * 1024 * 1024, (cap * 3) // 4))
    except Exception:
        return 48 * 1024 * 1024


_VMEM_LIMIT = _default_vmem_limit()


def _round_up(x, m):
    return ((x + m - 1) // m) * m


def _pad2(x, rows, cols):
    r, c = x.shape
    if r == rows and c == cols:
        return x
    return jnp.pad(x, ((0, rows - r), (0, cols - c)))


def _pick_tk(k_dim):
    kp = _round_up(k_dim, 128)
    for cand in (512, 384, 256, 128):
        if cand <= kp and kp % cand == 0:
            return cand, kp
    return kp, kp


# ----------------------------------------------------------------------------
# Pallas kernels
# ----------------------------------------------------------------------------
def _matmul_bn_kernel(*refs, relu, with_res):
    # inputs: a (tm, tk), b (tk, tn), shift (1, tn)[, residual (tm, tn)]
    # outputs: o (tm, tn); scratch: acc (tm, tn) f32
    if with_res:
        a_ref, b_ref, shift_ref, res_ref, o_ref, acc_ref = refs
    else:
        a_ref, b_ref, shift_ref, o_ref, acc_ref = refs
        res_ref = None

    k = pl.program_id(2)

    @pl.when(k == 0)
    def _():
        acc_ref[...] = jnp.zeros_like(acc_ref)

    acc_ref[...] += jnp.dot(
        a_ref[...], b_ref[...], preferred_element_type=jnp.float32
    )

    @pl.when(k == pl.num_programs(2) - 1)
    def _():
        y = acc_ref[...] + shift_ref[...]            # folded-BN shift / bias (f32)
        if res_ref is not None:
            y = y + res_ref[...].astype(jnp.float32)  # fused residual add
        if relu:
            y = jnp.maximum(y, 0.0)
        o_ref[...] = y.astype(o_ref.dtype)


def _gap_kernel(x_ref, o_ref, acc_ref, *, inv_s):
    # x: (N, ts, C) chunk of the flattened D*H*W axis; acc: (N, C) f32
    s = pl.program_id(0)

    @pl.when(s == 0)
    def _():
        acc_ref[...] = jnp.zeros_like(acc_ref)

    acc_ref[...] += jnp.sum(x_ref[...].astype(jnp.float32), axis=1)

    @pl.when(s == pl.num_programs(0) - 1)
    def _():
        o_ref[...] = acc_ref[...] * inv_s


# ----------------------------------------------------------------------------
# Fused tiled matmul + BN-shift + (residual) + (ReLU)
# ----------------------------------------------------------------------------
def _matmul_bn_act(a, b, shift, *, relu, residual=None, out_dtype=jnp.float32):
    # a: (M, K), b: (K, N) (BN scale already folded), shift: (N,) f32 bias.
    M, K = a.shape
    N = b.shape[1]

    tm = min(256, _round_up(M, 16))        # sublane-friendly (bf16 packs 16 rows)
    tn = min(256, _round_up(N, 128))       # lane-dense output stores
    tk, Kp = _pick_tk(K)
    Mp = _round_up(M, tm)
    Np = _round_up(N, tn)

    a_p = _pad2(a, Mp, Kp)
    b_p = _pad2(b, Kp, Np)
    shift_p = _pad2(shift.astype(jnp.float32).reshape(1, N), 1, Np)

    in_specs = [
        pl.BlockSpec((tm, tk), lambda i, j, k: (i, k)),
        pl.BlockSpec((tk, tn), lambda i, j, k: (k, j)),
        pl.BlockSpec((1, tn), lambda i, j, k: (0, j)),
    ]
    operands = [a_p, b_p, shift_p]
    with_res = residual is not None
    if with_res:
        operands.append(_pad2(residual, Mp, Np))
        in_specs.append(pl.BlockSpec((tm, tn), lambda i, j, k: (i, j)))

    out = pl.pallas_call(
        functools.partial(_matmul_bn_kernel, relu=relu, with_res=with_res),
        out_shape=jax.ShapeDtypeStruct((Mp, Np), out_dtype),
        grid_spec=pltpu.PrefetchScalarGridSpec(
            num_scalar_prefetch=0,
            grid=(Mp // tm, Np // tn, Kp // tk),
            in_specs=in_specs,
            out_specs=pl.BlockSpec((tm, tn), lambda i, j, k: (i, j)),
            scratch_shapes=[pltpu.VMEM((tm, tn), jnp.float32)],
        ),
        compiler_params=pltpu.CompilerParams(
            dimension_semantics=("parallel", "parallel", "arbitrary"),
            vmem_limit_bytes=_VMEM_LIMIT,
        ),
    )(*operands)
    return out[:M, :N]


# ----------------------------------------------------------------------------
# Global average pool (tiled reduction over the flattened spatial axis)
# ----------------------------------------------------------------------------
def _global_avg_pool(x):
    # x: (N, D, H, W, C) -> (N, C) f32
    N, D, H, W, C = x.shape
    S = D * H * W
    ts = min(512, _round_up(S, 16))
    Sp = _round_up(S, ts)
    x3 = x.reshape(N, S, C)
    if Sp != S:
        x3 = jnp.pad(x3, ((0, 0), (0, Sp - S), (0, 0)))

    return pl.pallas_call(
        functools.partial(_gap_kernel, inv_s=1.0 / float(S)),
        out_shape=jax.ShapeDtypeStruct((N, C), jnp.float32),
        grid_spec=pltpu.PrefetchScalarGridSpec(
            num_scalar_prefetch=0,
            grid=(Sp // ts,),
            in_specs=[pl.BlockSpec((N, ts, C), lambda s: (0, s, 0))],
            out_specs=pl.BlockSpec((N, C), lambda s: (0, 0)),
            scratch_shapes=[pltpu.VMEM((N, C), jnp.float32)],
        ),
        compiler_params=pltpu.CompilerParams(
            dimension_semantics=("arbitrary",),
            vmem_limit_bytes=_VMEM_LIMIT,
        ),
    )(x3)


def _linear(x, w, b):
    # w: PyTorch layout (out, in); b: (out,).  Reuses the fused matmul kernel.
    wt = jnp.transpose(w)                  # (in, out)
    return _matmul_bn_act(x, wt, b, relu=False, out_dtype=jnp.float32)


# ----------------------------------------------------------------------------
# Conv3d (im2col glue in JAX, matmul hot path in Pallas)
# ----------------------------------------------------------------------------
# TODO(synk): fuse im2col patch extraction into the matmul pipeline (index_map
# over output (d,h,w) tiles + per-tap accumulation) to avoid the HBM-resident
# patch blow-up at realistic clip sizes; bf16 patches halve it for now.
def _im2col(x, ksize, stride, padding):
    # x: (N, D, H, W, C), bf16
    N, D, H, W, C = x.shape
    kd, kh, kw = ksize
    sd, sh, sw = stride
    pd, ph, pw = padding
    xp = jnp.pad(x, ((0, 0), (pd, pd), (ph, ph), (pw, pw), (0, 0)))
    Do = (D + 2 * pd - kd) // sd + 1
    Ho = (H + 2 * ph - kh) // sh + 1
    Wo = (W + 2 * pw - kw) // sw + 1
    cols = []
    for it in range(kd):
        for ih in range(kh):
            for iw in range(kw):
                sl = xp[
                    :,
                    it : it + (Do - 1) * sd + 1 : sd,
                    ih : ih + (Ho - 1) * sh + 1 : sh,
                    iw : iw + (Wo - 1) * sw + 1 : sw,
                    :,
                ]
                cols.append(sl)
    # (N, Do, Ho, Wo, taps, C) -> (N*Do*Ho*Wo, taps*C); tap order = (kd, kh, kw)
    patches = jnp.stack(cols, axis=-2)
    patches = patches.reshape(N * Do * Ho * Wo, kd * kh * kw * C)
    return patches, (N, Do, Ho, Wo)


def _conv3d_bn(x, w, bn, stride, padding, *, relu, residual=None):
    # w: PyTorch layout (Cout, Cin, kd, kh, kw); x: (N, D, H, W, Cin) bf16
    Cout, Cin, kd, kh, kw = w.shape
    patches, (N, Do, Ho, Wo) = _im2col(x, (kd, kh, kw), stride, padding)

    gamma, beta, mean, var = bn
    scale = gamma / jnp.sqrt(var + 1e-5)
    shift = beta - mean * scale
    wmat = jnp.transpose(w, (2, 3, 4, 1, 0)).reshape(kd * kh * kw * Cin, Cout)
    wmat = (wmat * scale[None, :]).astype(jnp.bfloat16)   # fold BN scale into W

    res2 = None
    if residual is not None:
        res2 = residual.reshape(N * Do * Ho * Wo, Cout)

    out = _matmul_bn_act(
        patches.astype(jnp.bfloat16), wmat, shift,
        relu=relu, residual=res2, out_dtype=jnp.bfloat16,
    )
    return out.reshape(N, Do, Ho, Wo, Cout)


# ----------------------------------------------------------------------------
# r3d_18 parameter construction (deterministic synthetic init)
# ----------------------------------------------------------------------------
def _conv_w(key, cout, cin, k):
    return jax.random.normal(key, (cout, cin) + k, jnp.float32) * 0.05


def _bn_p(key, c):
    k1, k2, k3 = jax.random.split(key, 3)
    gamma = 1.0 + 0.1 * jax.random.normal(k1, (c,), jnp.float32)
    beta = 0.1 * jax.random.normal(k2, (c,), jnp.float32)
    mean = 0.1 * jax.random.normal(k3, (c,), jnp.float32)
    var = jnp.ones((c,), jnp.float32)
    return (gamma, beta, mean, var)


def init_video_encoder_params(key, output_dim):
    keys = iter(jax.random.split(key, 128))
    params = {}
    # Stem: Conv3d(3, 64, k=(3,7,7), s=(1,2,2), p=(1,3,3)) + BN + ReLU
    params["stem_w"] = _conv_w(next(keys), 64, 3, (3, 7, 7))
    params["stem_bn"] = _bn_p(next(keys), 64)
    layer_cfg = [(64, 64, 1), (64, 128, 2), (128, 256, 2), (256, 512, 2)]
    layers = []
    for cin, cout, stride in layer_cfg:
        blocks = []
        for bi in range(2):
            s = stride if bi == 0 else 1
            in_c = cin if bi == 0 else cout
            blk = {
                "stride": s,
                "conv1_w": _conv_w(next(keys), cout, in_c, (3, 3, 3)),
                "bn1": _bn_p(next(keys), cout),
                "conv2_w": _conv_w(next(keys), cout, cout, (3, 3, 3)),
                "bn2": _bn_p(next(keys), cout),
            }
            if bi == 0 and (s != 1 or in_c != cout):
                blk["down_w"] = _conv_w(next(keys), cout, in_c, (1, 1, 1))
                blk["down_bn"] = _bn_p(next(keys), cout)
            blocks.append(blk)
        layers.append(blocks)
    params["layers"] = layers
    # fc replaced by Linear(512, output_dim), as in VideoEncoder.__init__
    params["fc_w"] = jax.random.normal(next(keys), (output_dim, 512), jnp.float32) * 0.05
    params["fc_b"] = jnp.zeros((output_dim,), jnp.float32)
    return params


# ----------------------------------------------------------------------------
# Forward pass (VideoEncoder.forward == r3d_18 with replaced fc)
# ----------------------------------------------------------------------------
def video_encoder_forward(params, x_ncdhw):
    # NCDHW (PyTorch) -> NDHWC (kernel layout), bf16 activations
    x = jnp.transpose(x_ncdhw.astype(jnp.float32), (0, 2, 3, 4, 1))
    x = x.astype(jnp.bfloat16)
    x = _conv3d_bn(x, params["stem_w"], params["stem_bn"],
                   stride=(1, 2, 2), padding=(1, 3, 3), relu=True)
    for blocks in params["layers"]:
        for blk in blocks:
            s = blk["stride"]
            identity = x
            out = _conv3d_bn(x, blk["conv1_w"], blk["bn1"],
                             (s, s, s), (1, 1, 1), relu=True)
            if "down_w" in blk:
                identity = _conv3d_bn(x, blk["down_w"], blk["down_bn"],
                                      (s, s, s), (0, 0, 0), relu=False)
            # conv2 + BN + residual add + ReLU fused into one matmul epilogue
            x = _conv3d_bn(out, blk["conv2_w"], blk["bn2"],
                           (1, 1, 1), (1, 1, 1), relu=True, residual=identity)
    pooled = _global_avg_pool(x)                 # AdaptiveAvgPool3d(1) -> (N, 512)
    return _linear(pooled, params["fc_w"], params["fc_b"])  # (N, output_dim)


if __name__ == "__main__":
    key = jax.random.PRNGKey(0)
    kp, kx = jax.random.split(key)
    output_dim = 32
    params = init_video_encoder_params(kp, output_dim)
    # Small video clip: batch=2, channels=3 (RGB), frames=8, 16x16 spatial (NCDHW)
    x = jax.random.normal(kx, (2, 3, 8, 16, 16), jnp.float32)
    out = video_encoder_forward(params, x)
    out = jax.block_until_ready(out)
    assert out.shape == (2, output_dim), out.shape
    assert bool(jnp.all(jnp.isfinite(out)))
    print("KERNEL_OK")
</pallas_src>

<mosaic_0001>
module attributes {stable_mosaic.version = 11 : i64} {
  func.func @_matmul_bn_kernel(%arg0: i32, %arg1: i32, %arg2: i32, %arg3: memref<256x512xbf16, #tpu.memory_space<vmem>>, %arg4: memref<512x128xbf16, #tpu.memory_space<vmem>>, %arg5: memref<1x128xf32, #tpu.memory_space<vmem>>, %arg6: memref<256x128xbf16, #tpu.memory_space<vmem>>, %arg7: memref<256x128xf32, #tpu.memory_space<vmem>>) attributes {dimension_semantics = [#tpu.dimension_semantics<parallel>, #tpu.dimension_semantics<parallel>, #tpu.dimension_semantics<arbitrary>], iteration_bounds = array<i64: 4, 1, 1>, scalar_prefetch = 0 : i64, scratch_operands = 1 : i64, tpu.core_type = #tpu.core_type<tc>, window_params = [{transform_indices = @transform_0, window_bounds = array<i64: 256, 512>}, {transform_indices = @transform_1, window_bounds = array<i64: 512, 128>}, {transform_indices = @transform_2, window_bounds = array<i64: 1, 128>}, {transform_indices = @transform_3, window_bounds = array<i64: 256, 128>}]} {
    %c0_i32 = arith.constant 0 : i32
    %0 = arith.cmpi eq, %arg2, %c0_i32 : i32
    %1 = arith.extui %0 : i1 to i32
    %c0_i32_0 = arith.constant 0 : i32
    %2 = arith.cmpi ne, %1, %c0_i32_0 : i32
    scf.if %2 {
      %cst_10 = arith.constant 0.000000e+00 : f32
      %12 = vector.broadcast %cst_10 : f32 to vector<256x128xf32>
      %c0_11 = arith.constant 0 : index
      %c0_12 = arith.constant 0 : index
      %13 = vector.load %arg7[%c0_11, %c0_12] : memref<256x128xf32, #tpu.memory_space<vmem>>, vector<256x128xf32>
      tpu.vector_store %arg7[%c0_11, %c0_12], %12 {strides = array<i32>} : memref<256x128xf32, #tpu.memory_space<vmem>>, vector<256x128xf32>,
    } else {
    }
    %c0 = arith.constant 0 : index
    %c0_1 = arith.constant 0 : index
    %3 = vector.load %arg7[%c0, %c0_1] : memref<256x128xf32, #tpu.memory_space<vmem>>, vector<256x128xf32>
    %c0_2 = arith.constant 0 : index
    %c0_3 = arith.constant 0 : index
    %4 = vector.load %arg3[%c0_2, %c0_3] : memref<256x512xbf16, #tpu.memory_space<vmem>>, vector<256x512xbf16>
    %c0_4 = arith.constant 0 : index
    %c0_5 = arith.constant 0 : index
    %5 = vector.load %arg4[%c0_4, %c0_5] : memref<512x128xbf16, #tpu.memory_space<vmem>>, vector<512x128xbf16>
    %cst = arith.constant dense<0.000000e+00> : vector<256x128xf32>
    %6 = tpu.matmul %4, %5, %cst {dimension_numbers = #tpu.dot_dimension_numbers<[1], [0], [0], [1], [0, 0, 1, 1], [], []>} : vector<256x512xbf16>, vector<512x128xbf16>, vector<256x128xf32> -> vector<256x128xf32>
    %7 = arith.addf %3, %6 : vector<256x128xf32>
    %c0_6 = arith.constant 0 : index
    %c0_7 = arith.constant 0 : index
    %8 = vector.load %arg7[%c0_6, %c0_7] : memref<256x128xf32, #tpu.memory_space<vmem>>, vector<256x128xf32>
    tpu.vector_store %arg7[%c0_6, %c0_7], %7 {strides = array<i32>} : memref<256x128xf32, #tpu.memory_space<vmem>>, vector<256x128xf32>,
    %c0_i32_8 = arith.constant 0 : i32
    %9 = arith.cmpi eq, %arg2, %c0_i32_8 : i32
    %10 = arith.extui %9 : i1 to i32
    %c0_i32_9 = arith.constant 0 : i32
    %11 = arith.cmpi ne, %10, %c0_i32_9 : i32
    scf.if %11 {
      %c0_10 = arith.constant 0 : index
      %c0_11 = arith.constant 0 : index
      %12 = vector.load %arg7[%c0_10, %c0_11] : memref<256x128xf32, #tpu.memory_space<vmem>>, vector<256x128xf32>
      %c0_12 = arith.constant 0 : index
      %c0_13 = arith.constant 0 : index
      %13 = vector.load %arg5[%c0_12, %c0_13] : memref<1x128xf32, #tpu.memory_space<vmem>>, vector<1x128xf32>
      %14 = vector.broadcast %13 : vector<1x128xf32> to vector<256x128xf32>
      %15 = arith.addf %12, %14 : vector<256x128xf32>
      %cst_14 = arith.constant 0.000000e+00 : f32
      %16 = vector.broadcast %cst_14 : f32 to vector<256x128xf32>
      %17 = arith.maximumf %15, %16 : vector<256x128xf32>
      %18 = arith.truncf %17 : vector<256x128xf32> to vector<256x128xbf16>
      %c0_15 = arith.constant 0 : index
      %c0_16 = arith.constant 0 : index
      %19 = vector.load %arg6[%c0_15, %c0_16] : memref<256x128xbf16, #tpu.memory_space<vmem>>, vector<256x128xbf16>
      tpu.vector_store %arg6[%c0_15, %c0_16], %18 {strides = array<i32>} : memref<256x128xbf16, #tpu.memory_space<vmem>>, vector<256x128xbf16>,
    } else {
    }
    return
  }
  func.func @transform_0(%arg0: i32, %arg1: i32, %arg2: i32) -> (i32, i32) {
    %c0_i32 = arith.constant 0 : i32
    return %arg0, %arg2 : i32, i32
  }
  func.func @transform_1(%arg0: i32, %arg1: i32, %arg2: i32) -> (i32, i32) {
    %c0_i32 = arith.constant 0 : i32
    return %arg2, %arg1 : i32, i32
  }
  func.func @transform_2(%arg0: i32, %arg1: i32, %arg2: i32) -> (i32, i32) {
    %c0_i32 = arith.constant 0 : i32
    %c0_i32_0 = arith.constant 0 : i32
    return %c0_i32, %arg1 : i32, i32
  }
  func.func @transform_3(%arg0: i32, %arg1: i32, %arg2: i32) -> (i32, i32) {
    %c0_i32 = arith.constant 0 : i32
    return %arg0, %arg1 : i32, i32
  }
}

</mosaic_0001>

<llo_original>
// kernel: tpu_custom_call.1
$region0: #{tpu_custom_call.1}
  #allocation0 [shape = 'u32[]', space=smem, size = 0x4, offset = 0x4, fixed_abs, tag = 'smem constant byte address 0x4 - core index']
  #allocation1 [shape = 'u32[144,128]{1,0:T(1,128)}', space=vmem, size = 0x12000, scoped, tag = 'internal scratch']
  #allocation2 [shape = 'f32[256,128]{1,0:T(8,128)}', space=vmem, size = 0x20000, scoped, tag = 'scratch operand']
  %s0 = inlined_call_operand.hbm [shape: bf16[1024,512], index: 0, kind: input, shape index: {}]
  %s1 = inlined_call_operand.hbm [shape: bf16[512,128], index: 1, kind: input, shape index: {}]
  %s2 = inlined_call_operand.vmem [shape: f32[1,128], index: 2, kind: input, shape index: {}]
  %s3 = inlined_call_operand.hbm [shape: bf16[1024,128], index: 3, kind: output, shape index: {}]
  %s4 = sld [smem:[#allocation0]]
  $region61: #{tpu_custom_call.1} parent=0
    _
  %s6 = ssub.s32 1, %s4
  %s7 = scalar_select 0, %s6, %s4
  $region1: #{tpu_custom_call.1} parent=0
    #allocation3 [shape = 'u8[524288]{0}', space=vmem, size = 0x80000, scoped, tag = 'input window, operand 0']
    #allocation4 [shape = 's32[2]{0}', space=sflag, size = 0x8, scoped, tag = 'scoped memory for tpu_custom_call.1']
    #allocation5 [shape = 's32[2]{0}', space=sflag, size = 0x8, scoped, tag = 'scoped memory for tpu_custom_call.1']
    #allocation6 [shape = 'u8[131072]{0}', space=vmem, size = 0x20000, scoped, tag = 'input window, operand 1, single buffered']
    #allocation7 [shape = 's32[1]{0}', space=sflag, size = 0x4, scoped, tag = 'scoped memory for tpu_custom_call.1']
    #allocation8 [shape = 'u8[131072]{0}', space=vmem, size = 0x20000, scoped, tag = 'output window, operand 0']
    %8 = vsyncpa [#allocation4], 0
    %s9 = scalar_lea.sflag [#allocation4], 1
    %10 = vsyncpa %s9, 0
    %11 = vsyncpa [#allocation7], 0
    %12 = vsyncpa [#allocation5], 0
    %s13 = scalar_lea.sflag [#allocation5], 1
    %14 = vsyncpa %s13, 0
    loop: start=0, step=1, limit=6
    $region2: #{tpu_custom_call.1} parent=1 // loop_pre_header
      _
    $region3: #{tpu_custom_call.1} parent=1 // loop_header
      %s16 = sphi 0, %s20
      %p17 = scmp.ge.s32.totalorder %s16, 6
      %s23 = sphi 0, %s42
      %s24 = sphi 0, %s38
      %s25 = sphi 0, %s34
      %s26 = sphi 0, %s23
      %s27 = sphi 0, %s24
      %s28 = sphi 0, %s25
      %s29 = sphi 0, %s26
      %s30 = sphi 0, %s27
      %s31 = sphi 0, %s28
      %s47 = sphi 0, %s49
      %s50 = sphi 0, %s47
      %s51 = sphi 0, %s50
      %s67 = sphi 0, %s51
      %s75 = sphi 0, %s77
      %s78 = sphi 0, %s75
      %s79 = sphi 0, %s78
      %s95 = sphi 0, %s79
      %s101 = sphi 0, %s103
      %s104 = sphi 0, %s101
      %s105 = sphi 0, %s104
      %s121 = sphi 0, %s105
      %s129 = sphi 0, %s131
      %s132 = sphi 0, %s129
      %s133 = sphi 0, %s132
      %s149 = sphi 0, %s133
    $region4: #{tpu_custom_call.1} parent=1 // loop_header_branch
      %19 = sbr.rel (%p17) target = $region8
    $region5: #{tpu_custom_call.1} parent=1 // loop_body
      %s21 = ssub.s32 %s16, 1
      %s22 = ssub.s32 %s16, 2
      %s32 = sadd.s32 1, %s25
      %p33 = scmp.ge.s32.totalorder %s32, 1
      %s34 = scalar_select %p33, 0, %s32
      %s35 = sadd.s32 1, %s24
      %s36 = scalar_select %p33, %s35, %s24
      %p37 = scmp.ge.s32.totalorder %s36, 1
      %s38 = scalar_select %p37, 0, %s36
      %s39 = sadd.s32 1, %s23
      %s40 = scalar_select %p37, %s39, %s23
      %p41 = scmp.ge.s32.totalorder %s40, 4
      %s42 = scalar_select %p41, 0, %s40
      %s43 = ssub.s32 %s23, %s42
      %s44 = ssub.s32 %s25, %s34
      %s45 = sor.u32 %s43, %s44
      %p46 = scmp.eq.s32.totalorder %s45, 0
      %s48 = sadd.s32 %s47, 1
      %s49 = scalar_select %p46, %s47, %s48
      %p52 = pneg %p46
      %p53 = scmp.eq.s32.totalorder %s16, 3
      %p54 = por %p52, %p53
      %p55 = scmp.ne.s32.totalorder %s47, %s50
      %p56 = scmp.eq.s32.totalorder %s16, 0
      %p57 = por %p55, %p56
      %p58 = scmp.ne.s32.totalorder %s47, %s50
      %p59 = scmp.eq.s32.totalorder %s21, 3
      %p60 = por %p58, %p59
      %p61 = scmp.ne.s32.totalorder %s50, %s51
      %p62 = scmp.eq.s32.totalorder %s21, 0
      %p63 = por %p61, %p62
      %p64 = scmp.ne.s32.totalorder %s50, %s51
      %p65 = scmp.eq.s32.totalorder %s22, 3
      %p66 = por %p64, %p65
      %p68 = scmp.ne.s32.totalorder %s51, %s67
      %p69 = scmp.eq.s32.totalorder %s22, 0
      %p70 = por %p68, %p69
      %s71 = ssub.s32 %s25, %s34
      %s72 = ssub.s32 %s24, %s38
      %s73 = sor.u32 %s71, %s72
      %p74 = scmp.eq.s32.totalorder %s73, 0
      %s76 = sadd.s32 %s75, 1
      %s77 = scalar_select %p74, %s75, %s76
      %p80 = pneg %p74
      %p81 = scmp.eq.s32.totalorder %s16, 3
      %p82 = por %p80, %p81
      %p83 = scmp.ne.s32.totalorder %s75, %s78
      %p84 = scmp.eq.s32.totalorder %s16, 0
      %p85 = por %p83, %p84
      %p86 = scmp.ne.s32.totalorder %s75, %s78
      %p87 = scmp.eq.s32.totalorder %s21, 3
      %p88 = por %p86, %p87
      %p89 = scmp.ne.s32.totalorder %s78, %s79
      %p90 = scmp.eq.s32.totalorder %s21, 0
      %p91 = por %p89, %p90
      %p92 = scmp.ne.s32.totalorder %s78, %s79
      %p93 = scmp.eq.s32.totalorder %s22, 3
      %p94 = por %p92, %p93
      %p96 = scmp.ne.s32.totalorder %s79, %s95
      %p97 = scmp.eq.s32.totalorder %s22, 0
      %p98 = por %p96, %p97
      %s99 = ssub.s32 %s24, %s38
      %p100 = scmp.eq.s32.totalorder %s99, 0
      %s102 = sadd.s32 %s101, 1
      %s103 = scalar_select %p100, %s101, %s102
      %p106 = pneg %p100
      %p107 = scmp.eq.s32.totalorder %s16, 3
      %p108 = por %p106, %p107
      %p109 = scmp.ne.s32.totalorder %s101, %s104
      %p110 = scmp.eq.s32.totalorder %s16, 0
      %p111 = por %p109, %p110
      %p112 = scmp.ne.s32.totalorder %s101, %s104
      %p113 = scmp.eq.s32.totalorder %s21, 3
      %p114 = por %p112, %p113
      %p115 = scmp.ne.s32.totalorder %s104, %s105
      %p116 = scmp.eq.s32.totalorder %s21, 0
      %p117 = por %p115, %p116
      %p118 = scmp.ne.s32.totalorder %s104, %s105
      %p119 = scmp.eq.s32.totalorder %s22, 3
      %p120 = por %p118, %p119
      %p122 = scmp.ne.s32.totalorder %s105, %s121
      %p123 = scmp.eq.s32.totalorder %s22, 0
      %p124 = por %p122, %p123
      %s125 = ssub.s32 %s23, %s42
      %s126 = ssub.s32 %s24, %s38
      %s127 = sor.u32 %s125, %s126
      %p128 = scmp.eq.s32.totalorder %s127, 0
      %s130 = sadd.s32 %s129, 1
      %s131 = scalar_select %p128, %s129, %s130
      %p134 = pneg %p128
      %p135 = scmp.eq.s32.totalorder %s16, 3
      %p136 = por %p134, %p135
      %p137 = scmp.ne.s32.totalorder %s129, %s132
      %p138 = scmp.eq.s32.totalorder %s16, 0
      %p139 = por %p137, %p138
      %p140 = scmp.ne.s32.totalorder %s129, %s132
      %p141 = scmp.eq.s32.totalorder %s21, 3
      %p142 = por %p140, %p141
      %p143 = scmp.ne.s32.totalorder %s132, %s133
      %p144 = scmp.eq.s32.totalorder %s21, 0
      %p145 = por %p143, %p144
      %p146 = scmp.ne.s32.totalorder %s132, %s133
      %p147 = scmp.eq.s32.totalorder %s22, 3
      %p148 = por %p146, %p147
      %p150 = scmp.ne.s32.totalorder %s133, %s149
      %p151 = scmp.eq.s32.totalorder %s22, 0
      %p152 = por %p150, %p151
      %p153 = scmp.le.s32.totalorder 1, %s16
      %p154 = scmp.lt.s32.totalorder %s16, 5
      %p155 = pnand %p153, %p154
      %p156 = pneg %p155
      // Predicated region
      $region9: #{tpu_custom_call.1} parent=5 // pred_check
        _
      $region10: #{tpu_custom_call.1} parent=5 // pred_check_branch
        %158 = sbr.rel (%p155) target = $region12
      $region11: #{tpu_custom_call.1} parent=5 // pred_region
        %s159 = ssub.s32 %s16, 1
        // Predicated region
        $region13: #{tpu_custom_call.1} parent=11 // pred_check
          %p160 = pneg %p91
        $region14: #{tpu_custom_call.1} parent=11 // pred_check_branch
          %162 = sbr.rel (%p160) target = $region16
        $region15: #{tpu_custom_call.1} parent=11 // pred_region
          %s163 = smul.u32 64, %s28
          %s165 = ssub.s32 4096, 4096
          %166 = vsyncadd [#allocation7], %s165
          %s167 = sadd.s32 %s27, %s163
          %s168 = smul.addr %s167, 64
          %s169 = scalar_lea.hbm %s1, %s168
          %s170 = sshll.u32 [#allocation6], 4
          %s171 = int_to_ptr.vmem [resolvable:$true] %s170
          %176 = dma.hbm_to_vmem [thread:$0]  %s169, 4096, %s171, [#allocation7], 64, 64, 4
        $region16: #{tpu_custom_call.1} parent=11 // pred_fallthru
          _
        // Predicated region
        $region17: #{tpu_custom_call.1} parent=11 // pred_check
          %p177 = pneg %p117
        $region18: #{tpu_custom_call.1} parent=11 // pred_check_branch
          %179 = sbr.rel (%p177) target = $region20
        $region19: #{tpu_custom_call.1} parent=11 // pred_region
          %p180 = scmp.lt.s32.totalorder %s27, 0
          %s181 = scalar_select %p180, %s27, 0
          %s182 = scalar_lea.vmem %s2, %s181
        $region20: #{tpu_custom_call.1} parent=11 // pred_fallthru
          _
      $region12: #{tpu_custom_call.1} parent=5 // pred_fallthru
        _
      %p183 = scmp.lt.s32.totalorder %s16, 4
      // Predicated region
      $region21: #{tpu_custom_call.1} parent=5 // pred_check
        %p184 = pneg %p183
      $region22: #{tpu_custom_call.1} parent=5 // pred_check_branch
        %186 = sbr.rel (%p184) target = $region24
      $region23: #{tpu_custom_call.1} parent=5 // pred_region
        // Predicated region
        $region25: #{tpu_custom_call.1} parent=23 // pred_check
          %p187 = pneg %p57
        $region26: #{tpu_custom_call.1} parent=23 // pred_check_branch
          %189 = sbr.rel (%p187) target = $region28
        $region27: #{tpu_custom_call.1} parent=23 // pred_region
          %s190 = sand.u32 %s47, 1
          %s191 = scalar_lea.sflag [#allocation4], %s190
          %s192 = sand.u32 %s47, 1
          %s193 = smul.addr %s192, 512
          %s194 = scalar_lea.vmem [#allocation3], %s193
          %s195 = smul.u32 32, %s23
          %s196 = smul.u32 4, %s25
          %s198 = ssub.s32 8192, 8192
          %199 = vsyncadd %s191, %s198
          %s200 = smul.addr %s195, 4
          %s201 = sadd.s32 %s196, %s200
          %s202 = smul.addr %s201, 64
          %s203 = scalar_lea.hbm %s0, %s202
          %s204 = sshll.u32 %s194, 4
          %s205 = int_to_ptr.vmem [resolvable:$true] %s204
          %210 = dma.hbm_to_vmem [thread:$0]  %s203, 8192, %s205, %s191, 256, 256, 16
        $region28: #{tpu_custom_call.1} parent=23 // pred_fallthru
          _
      $region24: #{tpu_custom_call.1} parent=5 // pred_fallthru
        _
      %p211 = scmp.le.s32.totalorder 1, %s16
      %p212 = scmp.lt.s32.totalorder %s16, 5
      %p213 = pnand %p211, %p212
      %p214 = pneg %p213
      // Predicated region
      $region29: #{tpu_custom_call.1} parent=5 // pred_check
        _
      $region30: #{tpu_custom_call.1} parent=5 // pred_check_branch
        %216 = sbr.rel (%p213) target = $region32
      $region31: #{tpu_custom_call.1} parent=5 // pred_region
        %s217 = ssub.s32 %s16, 1
        %s218 = sand.u32 %s50, 1
        %s219 = scalar_lea.sflag [#allocation4], %s218
        %s220 = sand.u32 %s50, 1
        %s221 = smul.addr %s220, 512
        %s222 = scalar_lea.vmem [#allocation3], %s221
        // Predicated region
        $region33: #{tpu_custom_call.1} parent=31 // pred_check
          %p223 = pneg %p63
        $region34: #{tpu_custom_call.1} parent=31 // pred_check_branch
          %225 = sbr.rel (%p223) target = $region36
        $region35: #{tpu_custom_call.1} parent=31 // pred_region
          %226 = dma.done %s219, 8192
        $region36: #{tpu_custom_call.1} parent=31 // pred_fallthru
          _
        // Predicated region
        $region37: #{tpu_custom_call.1} parent=31 // pred_check
          %p227 = pneg %p91
        $region38: #{tpu_custom_call.1} parent=31 // pred_check_branch
          %229 = sbr.rel (%p227) target = $region40
        $region39: #{tpu_custom_call.1} parent=31 // pred_region
          %230 = dma.done [#allocation7], 4096
        $region40: #{tpu_custom_call.1} parent=31 // pred_fallthru
          _
        %s231 = sand.u32 %s50, 1
        %s232 = scalar_lea.sflag [#allocation4], %s231
        %s233 = sand.u32 %s50, 1
        %s234 = smul.addr %s233, 512
        %s235 = scalar_lea.vmem [#allocation3], %s234
        %p236 = pneg %p63
        %p237 = pneg %p60
        %p238 = pneg %p91
        %p239 = pneg %p88
        %p240 = scmp.lt.s32.totalorder %s27, 0
        %s241 = scalar_select %p240, %s27, 0
        %s242 = scalar_lea.vmem %s2, %s241
        %p243 = pneg %p117
        %p244 = pneg %p114
        %p245 = pneg %p145
        %p246 = pneg %p142
        %s247 = sand.u32 %s132, 1
        %s248 = scalar_lea.sflag [#allocation5], %s247
        %s249 = sand.u32 %s132, 1
        %s250 = smul.addr %s249, 128
        %s251 = scalar_lea.vmem [#allocation8], %s250
        %s252 = smul.u32 32, %s26
        %s253 = smul.u32 4, %s28
        %s254 = smul.u32 64, %s28
        %p255 = scmp.lt.s32.totalorder %s27, 0
        %s256 = scalar_select %p255, %s27, 0
        %s257 = scalar_lea.vmem %s2, %s256
        %s258 = smul.u32 32, %s26
        %p260 = scmp.eq.s32.totalorder %s28, 0
        // Predicated region
        $region41: #{tpu_custom_call.1} parent=31 // pred_check
          %p261 = pneg %p260
        $region42: #{tpu_custom_call.1} parent=31 // pred_check_branch
          %263 = sbr.rel (%p261) target = $region44
        $region43: #{tpu_custom_call.1} parent=31 // pred_region
          %264 = vst [vmem:[#allocation2] sm:$0xff] 0.0
          %265 = vst [vmem:[#allocation2 + $0x8] sm:$0xff] 0.0
          %266 = vst [vmem:[#allocation2 + $0x10] sm:$0xff] 0.0
          %267 = vst [vmem:[#allocation2 + $0x18] sm:$0xff] 0.0
          %268 = vst [vmem:[#allocation2 + $0x20] sm:$0xff] 0.0
          %269 = vst [vmem:[#allocation2 + $0x28] sm:$0xff] 0.0
          %270 = vst [vmem:[#allocation2 + $0x30] sm:$0xff] 0.0
          %271 = vst [vmem:[#allocation2 + $0x38] sm:$0xff] 0.0
          %272 = vst [vmem:[#allocation2 + $0x40] sm:$0xff] 0.0
          %273 = vst [vmem:[#allocation2 + $0x48] sm:$0xff] 0.0
          %274 = vst [vmem:[#allocation2 + $0x50] sm:$0xff] 0.0
          %275 = vst [vmem:[#allocation2 + $0x58] sm:$0xff] 0.0
          %276 = vst [vmem:[#allocation2 + $0x60] sm:$0xff] 0.0
          %277 = vst [vmem:[#allocation2 + $0x68] sm:$0xff] 0.0
          %278 = vst [vmem:[#allocation2 + $0x70] sm:$0xff] 0.0
          %279 = vst [vmem:[#allocation2 + $0x78] sm:$0xff] 0.0
          %280 = vst [vmem:[#allocation2 + $0x80] sm:$0xff] 0.0
          %281 = vst [vmem:[#allocation2 + $0x88] sm:$0xff] 0.0
          %282 = vst [vmem:[#allocation2 + $0x90] sm:$0xff] 0.0
          %283 = vst [vmem:[#allocation2 + $0x98] sm:$0xff] 0.0
          %284 = vst [vmem:[#allocation2 + $0xa0] sm:$0xff] 0.0
          %285 = vst [vmem:[#allocation2 + $0xa8] sm:$0xff] 0.0
          %286 = vst [vmem:[#allocation2 + $0xb0] sm:$0xff] 0.0
          %287 = vst [vmem:[#allocation2 + $0xb8] sm:$0xff] 0.0
          %288 = vst [vmem:[#allocation2 + $0xc0] sm:$0xff] 0.0
          %289 = vst [vmem:[#allocation2 + $0xc8] sm:$0xff] 0.0
          %290 = vst [vmem:[#allocation2 + $0xd0] sm:$0xff] 0.0
          %291 = vst [vmem:[#allocation2 + $0xd8] sm:$0xff] 0.0
          %292 = vst [vmem:[#allocation2 + $0xe0] sm:$0xff] 0.0
          %293 = vst [vmem:[#allocation2 + $0xe8] sm:$0xff] 0.0
          %294 = vst [vmem:[#allocation2 + $0xf0] sm:$0xff] 0.0
          %295 = vst [vmem:[#allocation2 + $0xf8] sm:$0xff] 0.0
        $region44: #{tpu_custom_call.1} parent=31 // pred_fallthru
          _
        %v296 = vld [vmem:[#allocation2] sm:$0xff]
        %v297 = vld [vmem:[#allocation2 + $0x8] sm:$0xff]
        %v298 = vld [vmem:[#allocation2 + $0x10] sm:$0xff]
        %v299 = vld [vmem:[#allocation2 + $0x18] sm:$0xff]
        %v300 = vld [vmem:[#allocation2 + $0x20] sm:$0xff]
        %v301 = vld [vmem:[#allocation2 + $0x28] sm:$0xff]
        %v302 = vld [vmem:[#allocation2 + $0x30] sm:$0xff]
        %v303 = vld [vmem:[#allocation2 + $0x38] sm:$0xff]
        %v304 = vld [vmem:[#allocation2 + $0x40] sm:$0xff]
        %v305 = vld [vmem:[#allocation2 + $0x48] sm:$0xff]
        %v306 = vld [vmem:[#allocation2 + $0x50] sm:$0xff]
        %v307 = vld [vmem:[#allocation2 + $0x58] sm:$0xff]
        %v308 = vld [vmem:[#allocation2 + $0x60] sm:$0xff]
        %v309 = vld [vmem:[#allocation2 + $0x68] sm:$0xff]
        %v310 = vld [vmem:[#allocation2 + $0x70] sm:$0xff]
        %v311 = vld [vmem:[#allocation2 + $0x78] sm:$0xff]
        %v312 = vld [vmem:[#allocation2 + $0x80] sm:$0xff]
        %v313 = vld [vmem:[#allocation2 + $0x88] sm:$0xff]
        %v314 = vld [vmem:[#allocation2 + $0x90] sm:$0xff]
        %v315 = vld [vmem:[#allocation2 + $0x98] sm:$0xff]
        %v316 = vld [vmem:[#allocation2 + $0xa0] sm:$0xff]
        %v317 = vld [vmem:[#allocation2 + $0xa8] sm:$0xff]
        %v318 = vld [vmem:[#allocation2 + $0xb0] sm:$0xff]
        %v319 = vld [vmem:[#allocation2 + $0xb8] sm:$0xff]
        %v320 = vld [vmem:[#allocation2 + $0xc0] sm:$0xff]
        %v321 = vld [vmem:[#allocation2 + $0xc8] sm:$0xff]
        %v322 = vld [vmem:[#allocation2 + $0xd0] sm:$0xff]
        %v323 = vld [vmem:[#allocation2 + $0xd8] sm:$0xff]
        %v324 = vld [vmem:[#allocation2 + $0xe0] sm:$0xff]
        %v325 = vld [vmem:[#allocation2 + $0xe8] sm:$0xff]
        %v326 = vld [vmem:[#allocation2 + $0xf0] sm:$0xff]
        %v327 = vld [vmem:[#allocation2 + $0xf8] sm:$0xff]
        %v328 = vld [vmem:[%s222] sm:$0xff]
        %v329 = vld [vmem:[%s222 + $0x8] sm:$0xff]
        %v330 = vld [vmem:[%s222 + $0x10] sm:$0xff]
        %v331 = vld [vmem:[%s222 + $0x18] sm:$0xff]
        %v332 = vld [vmem:[%s222 + $0x20] sm:$0xff]
        %v333 = vld [vmem:[%s222 + $0x28] sm:$0xff]
        %v334 = vld [vmem:[%s222 + $0x30] sm:$0xff]
        %v335 = vld [vmem:[%s222 + $0x38] sm:$0xff]
        %v336 = vld [vmem:[%s222 + $0x40] sm:$0xff]
        %v337 = vld [vmem:[%s222 + $0x48] sm:$0xff]
        %v338 = vld [vmem:[%s222 + $0x50] sm:$0xff]
        %v339 = vld [vmem:[%s222 + $0x58] sm:$0xff]
        %v340 = vld [vmem:[%s222 + $0x60] sm:$0xff]
        %v341 = vld [vmem:[%s222 + $0x68] sm:$0xff]
        %v342 = vld [vmem:[%s222 + $0x70] sm:$0xff]
        %v343 = vld [vmem:[%s222 + $0x78] sm:$0xff]
        %v344 = vld [vmem:[%s222 + $0x80] sm:$0xff]
        %v345 = vld [vmem:[%s222 + $0x88] sm:$0xff]
        %v346 = vld [vmem:[%s222 + $0x90] sm:$0xff]
        %v347 = vld [vmem:[%s222 + $0x98] sm:$0xff]
        %v348 = vld [vmem:[%s222 + $0xa0] sm:$0xff]
        %v349 = vld [vmem:[%s222 + $0xa8] sm:$0xff]
        %v350 = vld [vmem:[%s222 + $0xb0] sm:$0xff]
        %v351 = vld [vmem:[%s222 + $0xb8] sm:$0xff]
        %v352 = vld [vmem:[%s222 + $0xc0] sm:$0xff]
        %v353 = vld [vmem:[%s222 + $0xc8] sm:$0xff]
        %v354 = vld [vmem:[%s222 + $0xd0] sm:$0xff]
        %v355 = vld [vmem:[%s222 + $0xd8] sm:$0xff]
        %v356 = vld [vmem:[%s222 + $0xe0] sm:$0xff]
        %v357 = vld [vmem:[%s222 + $0xe8] sm:$0xff]
        %v358 = vld [vmem:[%s222 + $0xf0] sm:$0xff]
        %v359 = vld [vmem:[%s222 + $0xf8] sm:$0xff]
        %v360 = vld [vmem:[%s222 + $0x100] sm:$0xff]
        %v361 = vld [vmem:[%s222 + $0x108] sm:$0xff]
        %v362 = vld [vmem:[%s222 + $0x110] sm:$0xff]
        %v363 = vld [vmem:[%s222 + $0x118] sm:$0xff]
        %v364 = vld [vmem:[%s222 + $0x120] sm:$0xff]
        %v365 = vld [vmem:[%s222 + $0x128] sm:$0xff]
        %v366 = vld [vmem:[%s222 + $0x130] sm:$0xff]
        %v367 = vld [vmem:[%s222 + $0x138] sm:$0xff]
        %v368 = vld [vmem:[%s222 + $0x140] sm:$0xff]
        %v369 = vld [vmem:[%s222 + $0x148] sm:$0xff]
        %v370 = vld [vmem:[%s222 + $0x150] sm:$0xff]
        %v371 = vld [vmem:[%s222 + $0x158] sm:$0xff]
        %v372 = vld [vmem:[%s222 + $0x160] sm:$0xff]
        %v373 = vld [vmem:[%s222 + $0x168] sm:$0xff]
        %v374 = vld [vmem:[%s222 + $0x170] sm:$0xff]
        %v375 = vld [vmem:[%s222 + $0x178] sm:$0xff]
        %v376 = vld [vmem:[%s222 + $0x180] sm:$0xff]
        %v377 = vld [vmem:[%s222 + $0x188] sm:$0xff]
        %v378 = vld [vmem:[%s222 + $0x190] sm:$0xff]
        %v379 = vld [vmem:[%s222 + $0x198] sm:$0xff]
        %v380 = vld [vmem:[%s222 + $0x1a0] sm:$0xff]
        %v381 = vld [vmem:[%s222 + $0x1a8] sm:$0xff]
        %v382 = vld [vmem:[%s222 + $0x1b0] sm:$0xff]
        %v383 = vld [vmem:[%s222 + $0x1b8] sm:$0xff]
        %v384 = vld [vmem:[%s222 + $0x1c0] sm:$0xff]
        %v385 = vld [vmem:[%s222 + $0x1c8] sm:$0xff]
        %v386 = vld [vmem:[%s222 + $0x1d0] sm:$0xff]
        %v387 = vld [vmem:[%s222 + $0x1d8] sm:$0xff]
        %v388 = vld [vmem:[%s222 + $0x1e0] sm:$0xff]
        %v389 = vld [vmem:[%s222 + $0x1e8] sm:$0xff]
        %v390 = vld [vmem:[%s222 + $0x1f0] sm:$0xff]
        %v391 = vld [vmem:[%s222 + $0x1f8] sm:$0xff]
        %v392 = vld [vmem:[#allocation6] sm:$0xf]
        %v393 = vld [vmem:[#allocation6 + $0x4] sm:$0xf]
        %v394 = vld [vmem:[#allocation6 + $0x8] sm:$0xf]
        %v395 = vld [vmem:[#allocation6 + $0xc] sm:$0xf]
        %v396 = vld [vmem:[#allocation6 + $0x10] sm:$0xf]
        %v397 = vld [vmem:[#allocation6 + $0x14] sm:$0xf]
        %v398 = vld [vmem:[#allocation6 + $0x18] sm:$0xf]
        %v399 = vld [vmem:[#allocation6 + $0x1c] sm:$0xf]
        %v400 = vld [vmem:[#allocation6 + $0x20] sm:$0xf]
        %v401 = vld [vmem:[#allocation6 + $0x24] sm:$0xf]
        %v402 = vld [vmem:[#allocation6 + $0x28] sm:$0xf]
        %v403 = vld [vmem:[#allocation6 + $0x2c] sm:$0xf]
        %v404 = vld [vmem:[#allocation6 + $0x30] sm:$0xf]
        %v405 = vld [vmem:[#allocation6 + $0x34] sm:$0xf]
        %v406 = vld [vmem:[#allocation6 + $0x38] sm:$0xf]
        %v407 = vld [vmem:[#allocation6 + $0x3c] sm:$0xf]
        %v408 = vld [vmem:[#allocation6 + $0x40] sm:$0xf]
        %v409 = vld [vmem:[#allocation6 + $0x44] sm:$0xf]
        %v410 = vld [vmem:[#allocation6 + $0x48] sm:$0xf]
        %v411 = vld [vmem:[#allocation6 + $0x4c] sm:$0xf]
        %v412 = vld [vmem:[#allocation6 + $0x50] sm:$0xf]
        %v413 = vld [vmem:[#allocation6 + $0x54] sm:$0xf]
        %v414 = vld [vmem:[#allocation6 + $0x58] sm:$0xf]
        %v415 = vld [vmem:[#allocation6 + $0x5c] sm:$0xf]
        %v416 = vld [vmem:[#allocation6 + $0x60] sm:$0xf]
        %v417 = vld [vmem:[#allocation6 + $0x64] sm:$0xf]
        %v418 = vld [vmem:[#allocation6 + $0x68] sm:$0xf]
        %v419 = vld [vmem:[#allocation6 + $0x6c] sm:$0xf]
        %v420 = vld [vmem:[#allocation6 + $0x70] sm:$0xf]
        %v421 = vld [vmem:[#allocation6 + $0x74] sm:$0xf]
        %v422 = vld [vmem:[#allocation6 + $0x78] sm:$0xf]
        %v423 = vld [vmem:[#allocation6 + $0x7c] sm:$0xf]
        %v424 = vld [vmem:[#allocation6 + $0x80] sm:$0xf]
        %v425 = vld [vmem:[#allocation6 + $0x84] sm:$0xf]
        %v426 = vld [vmem:[#allocation6 + $0x88] sm:$0xf]
        %v427 = vld [vmem:[#allocation6 + $0x8c] sm:$0xf]
        %v428 = vld [vmem:[#allocation6 + $0x90] sm:$0xf]
        %v429 = vld [vmem:[#allocation6 + $0x94] sm:$0xf]
        %v430 = vld [vmem:[#allocation6 + $0x98] sm:$0xf]
        %v431 = vld [vmem:[#allocation6 + $0x9c] sm:$0xf]
        %v432 = vld [vmem:[#allocation6 + $0xa0] sm:$0xf]
        %v433 = vld [vmem:[#allocation6 + $0xa4] sm:$0xf]
        %v434 = vld [vmem:[#allocation6 + $0xa8] sm:$0xf]
        %v435 = vld [vmem:[#allocation6 + $0xac] sm:$0xf]
        %v436 = vld [vmem:[#allocation6 + $0xb0] sm:$0xf]
        %v437 = vld [vmem:[#allocation6 + $0xb4] sm:$0xf]
        %v438 = vld [vmem:[#allocation6 + $0xb8] sm:$0xf]
        %v439 = vld [vmem:[#allocation6 + $0xbc] sm:$0xf]
        %v440 = vld [vmem:[#allocation6 + $0xc0] sm:$0xf]
        %v441 = vld [vmem:[#allocation6 + $0xc4] sm:$0xf]
        %v442 = vld [vmem:[#allocation6 + $0xc8] sm:$0xf]
        %v443 = vld [vmem:[#allocation6 + $0xcc] sm:$0xf]
        %v444 = vld [vmem:[#allocation6 + $0xd0] sm:$0xf]
        %v445 = vld [vmem:[#allocation6 + $0xd4] sm:$0xf]
        %v446 = vld [vmem:[#allocation6 + $0xd8] sm:$0xf]
        %v447 = vld [vmem:[#allocation6 + $0xdc] sm:$0xf]
        %v448 = vld [vmem:[#allocation6 + $0xe0] sm:$0xf]
        %v449 = vld [vmem:[#allocation6 + $0xe4] sm:$0xf]
        %v450 = vld [vmem:[#allocation6 + $0xe8] sm:$0xf]
        %v451 = vld [vmem:[#allocation6 + $0xec] sm:$0xf]
        %v452 = vld [vmem:[#allocation6 + $0xf0] sm:$0xf]
        %v453 = vld [vmem:[#allocation6 + $0xf4] sm:$0xf]
        %v454 = vld [vmem:[#allocation6 + $0xf8] sm:$0xf]
        %v455 = vld [vmem:[#allocation6 + $0xfc] sm:$0xf]
        %v520 = vunpack.c.l.b16 %v328
        %v521 = vunpack.c.h.b16 %v328
        %v522 = vunpack.c.l.b16 %v329
        %v523 = vunpack.c.h.b16 %v329
        %v524 = vunpack.c.l.b16 %v330
        %v525 = vunpack.c.h.b16 %v330
        %v526 = vunpack.c.l.b16 %v331
        %v527 = vunpack.c.h.b16 %v331
        %v528 = vunpack.c.l.b16 %v332
        %v529 = vunpack.c.h.b16 %v332
        %v530 = vunpack.c.l.b16 %v333
        %v531 = vunpack.c.h.b16 %v333
        %v532 = vunpack.c.l.b16 %v334
        %v533 = vunpack.c.h.b16 %v334
        %v534 = vunpack.c.l.b16 %v335
        %v535 = vunpack.c.h.b16 %v335
        %v536 = vunpack.c.l.b16 %v336
        %v537 = vunpack.c.h.b16 %v336
        %v538 = vunpack.c.l.b16 %v337
        %v539 = vunpack.c.h.b16 %v337
        %v540 = vunpack.c.l.b16 %v338
        %v541 = vunpack.c.h.b16 %v338
        %v542 = vunpack.c.l.b16 %v339
        %v543 = vunpack.c.h.b16 %v339
        %v544 = vunpack.c.l.b16 %v340
        %v545 = vunpack.c.h.b16 %v340
        %v546 = vunpack.c.l.b16 %v341
        %v547 = vunpack.c.h.b16 %v341
        %v548 = vunpack.c.l.b16 %v342
        %v549 = vunpack.c.h.b16 %v342
        %v550 = vunpack.c.l.b16 %v343
        %v551 = vunpack.c.h.b16 %v343
        %v552 = vunpack.c.l.b16 %v344
        %v553 = vunpack.c.h.b16 %v344
        %v554 = vunpack.c.l.b16 %v345
        %v555 = vunpack.c.h.b16 %v345
        %v556 = vunpack.c.l.b16 %v346
        %v557 = vunpack.c.h.b16 %v346
        %v558 = vunpack.c.l.b16 %v347
        %v559 = vunpack.c.h.b16 %v347
        %v560 = vunpack.c.l.b16 %v348
        %v561 = vunpack.c.h.b16 %v348
        %v562 = vunpack.c.l.b16 %v349
        %v563 = vunpack.c.h.b16 %v349
        %v564 = vunpack.c.l.b16 %v350
        %v565 = vunpack.c.h.b16 %v350
        %v566 = vunpack.c.l.b16 %v351
        %v567 = vunpack.c.h.b16 %v351
        %v568 = vunpack.c.l.b16 %v352
        %v569 = vunpack.c.h.b16 %v352
        %v570 = vunpack.c.l.b16 %v353
        %v571 = vunpack.c.h.b16 %v353
        %v572 = vunpack.c.l.b16 %v354
        %v573 = vunpack.c.h.b16 %v354
        %v574 = vunpack.c.l.b16 %v355
        %v575 = vunpack.c.h.b16 %v355
        %v576 = vunpack.c.l.b16 %v356
        %v577 = vunpack.c.h.b16 %v356
        %v578 = vunpack.c.l.b16 %v357
        %v579 = vunpack.c.h.b16 %v357
        %v580 = vunpack.c.l.b16 %v358
        %v581 = vunpack.c.h.b16 %v358
        %v582 = vunpack.c.l.b16 %v359
        %v583 = vunpack.c.h.b16 %v359
        %v584 = vunpack.c.l.b16 %v360
        %v585 = vunpack.c.h.b16 %v360
        %v586 = vunpack.c.l.b16 %v361
        %v587 = vunpack.c.h.b16 %v361
        %v588 = vunpack.c.l.b16 %v362
        %v589 = vunpack.c.h.b16 %v362
        %v590 = vunpack.c.l.b16 %v363
        %v591 = vunpack.c.h.b16 %v363
        %v592 = vunpack.c.l.b16 %v364
        %v593 = vunpack.c.h.b16 %v364
        %v594 = vunpack.c.l.b16 %v365
        %v595 = vunpack.c.h.b16 %v365
        %v596 = vunpack.c.l.b16 %v366
        %v597 = vunpack.c.h.b16 %v366
        %v598 = vunpack.c.l.b16 %v367
        %v599 = vunpack.c.h.b16 %v367
        %v600 = vunpack.c.l.b16 %v368
        %v601 = vunpack.c.h.b16 %v368
        %v602 = vunpack.c.l.b16 %v369
        %v603 = vunpack.c.h.b16 %v369
        %v604 = vunpack.c.l.b16 %v370
        %v605 = vunpack.c.h.b16 %v370
        %v606 = vunpack.c.l.b16 %v371
        %v607 = vunpack.c.h.b16 %v371
        %v608 = vunpack.c.l.b16 %v372
        %v609 = vunpack.c.h.b16 %v372
        %v610 = vunpack.c.l.b16 %v373
        %v611 = vunpack.c.h.b16 %v373
        %v612 = vunpack.c.l.b16 %v374
        %v613 = vunpack.c.h.b16 %v374
        %v614 = vunpack.c.l.b16 %v375
        %v615 = vunpack.c.h.b16 %v375
        %v616 = vunpack.c.l.b16 %v376
        %v617 = vunpack.c.h.b16 %v376
        %v618 = vunpack.c.l.b16 %v377
        %v619 = vunpack.c.h.b16 %v377
        %v620 = vunpack.c.l.b16 %v378
        %v621 = vunpack.c.h.b16 %v378
        %v622 = vunpack.c.l.b16 %v379
        %v623 = vunpack.c.h.b16 %v379
        %v624 = vunpack.c.l.b16 %v380
        %v625 = vunpack.c.h.b16 %v380
        %v626 = vunpack.c.l.b16 %v381
        %v627 = vunpack.c.h.b16 %v381
        %v628 = vunpack.c.l.b16 %v382
        %v629 = vunpack.c.h.b16 %v382
        %v630 = vunpack.c.l.b16 %v383
        %v631 = vunpack.c.h.b16 %v383
        %v632 = vunpack.c.l.b16 %v384
        %v633 = vunpack.c.h.b16 %v384
        %v634 = vunpack.c.l.b16 %v385
        %v635 = vunpack.c.h.b16 %v385
        %v636 = vunpack.c.l.b16 %v386
        %v637 = vunpack.c.h.b16 %v386
        %v638 = vunpack.c.l.b16 %v387
        %v639 = vunpack.c.h.b16 %v387
        %v640 = vunpack.c.l.b16 %v388
        %v641 = vunpack.c.h.b16 %v388
        %v642 = vunpack.c.l.b16 %v389
        %v643 = vunpack.c.h.b16 %v389
        %v644 = vunpack.c.l.b16 %v390
        %v645 = vunpack.c.h.b16 %v390
        %v646 = vunpack.c.l.b16 %v391
        %v647 = vunpack.c.h.b16 %v391
        %v648 = vpack.c.b16 %v524, %v520
        %v649 = vpack.c.b16 %v525, %v521
        %v650 = vpack.c.b16 %v526, %v522
        %v651 = vpack.c.b16 %v527, %v523
        %v652 = vpack.c.b16 %v532, %v528
        %v653 = vpack.c.b16 %v533, %v529
        %v654 = vpack.c.b16 %v534, %v530
        %v655 = vpack.c.b16 %v535, %v531
        %v656 = vpack.c.b16 %v540, %v536
        %v657 = vpack.c.b16 %v541, %v537
        %v658 = vpack.c.b16 %v542, %v538
        %v659 = vpack.c.b16 %v543, %v539
        %v660 = vpack.c.b16 %v548, %v544
        %v661 = vpack.c.b16 %v549, %v545
        %v662 = vpack.c.b16 %v550, %v546
        %v663 = vpack.c.b16 %v551, %v547
        %v664 = vpack.c.b16 %v556, %v552
        %v665 = vpack.c.b16 %v557, %v553
        %v666 = vpack.c.b16 %v558, %v554
        %v667 = vpack.c.b16 %v559, %v555
        %v668 = vpack.c.b16 %v564, %v560
        %v669 = vpack.c.b16 %v565, %v561
        %v670 = vpack.c.b16 %v566, %v562
        %v671 = vpack.c.b16 %v567, %v563
        %v672 = vpack.c.b16 %v572, %v568
        %v673 = vpack.c.b16 %v573, %v569
        %v674 = vpack.c.b16 %v574, %v570
        %v675 = vpack.c.b16 %v575, %v571
        %v676 = vpack.c.b16 %v580, %v576
        %v677 = vpack.c.b16 %v581, %v577
        %v678 = vpack.c.b16 %v582, %v578
        %v679 = vpack.c.b16 %v583, %v579
        %v680 = vpack.c.b16 %v588, %v584
        %v681 = vpack.c.b16 %v589, %v585
        %v682 = vpack.c.b16 %v590, %v586
        %v683 = vpack.c.b16 %v591, %v587
        %v684 = vpack.c.b16 %v596, %v592
        %v685 = vpack.c.b16 %v597, %v593
        %v686 = vpack.c.b16 %v598, %v594
        %v687 = vpack.c.b16 %v599, %v595
        %v688 = vpack.c.b16 %v604, %v600
        %v689 = vpack.c.b16 %v605, %v601
        %v690 = vpack.c.b16 %v606, %v602
        %v691 = vpack.c.b16 %v607, %v603
        %v692 = vpack.c.b16 %v612, %v608
        %v693 = vpack.c.b16 %v613, %v609
        %v694 = vpack.c.b16 %v614, %v610
        %v695 = vpack.c.b16 %v615, %v611
        %v696 = vpack.c.b16 %v620, %v616
        %v697 = vpack.c.b16 %v621, %v617
        %v698 = vpack.c.b16 %v622, %v618
        %v699 = vpack.c.b16 %v623, %v619
        %v700 = vpack.c.b16 %v628, %v624
        %v701 = vpack.c.b16 %v629, %v625
        %v702 = vpack.c.b16 %v630, %v626
        %v703 = vpack.c.b16 %v631, %v627
        %v704 = vpack.c.b16 %v636, %v632
        %v705 = vpack.c.b16 %v637, %v633
        %v706 = vpack.c.b16 %v638, %v634
        %v707 = vpack.c.b16 %v639, %v635
        %v708 = vpack.c.b16 %v644, %v640
        %v709 = vpack.c.b16 %v645, %v641
        %v710 = vpack.c.b16 %v646, %v642
        %v711 = vpack.c.b16 %v647, %v643
        %v840 = vunpack.c.l.b16 %v392
        %v841 = vunpack.c.l.b16 %v393
        %v842 = vunpack.c.l.b16 %v394
        %v843 = vunpack.c.l.b16 %v395
        %v844 = vunpack.c.l.b16 %v396
        %v845 = vunpack.c.l.b16 %v397
        %v846 = vunpack.c.l.b16 %v398
        %v847 = vunpack.c.l.b16 %v399
        %v848 = vunpack.c.l.b16 %v400
        %v849 = vunpack.c.l.b16 %v401
        %v850 = vunpack.c.l.b16 %v402
        %v851 = vunpack.c.l.b16 %v403
        %v852 = vunpack.c.l.b16 %v404
        %v853 = vunpack.c.l.b16 %v405
        %v854 = vunpack.c.l.b16 %v406
        %v855 = vunpack.c.l.b16 %v407
        %v856 = vunpack.c.l.b16 %v408
        %v857 = vunpack.c.l.b16 %v409
        %v858 = vunpack.c.l.b16 %v410
        %v859 = vunpack.c.l.b16 %v411
        %v860 = vunpack.c.l.b16 %v412
        %v861 = vunpack.c.l.b16 %v413
        %v862 = vunpack.c.l.b16 %v414
        %v863 = vunpack.c.l.b16 %v415
        %v864 = vunpack.c.l.b16 %v416
        %v865 = vunpack.c.l.b16 %v417
        %v866 = vunpack.c.l.b16 %v418
        %v867 = vunpack.c.l.b16 %v419
        %v868 = vunpack.c.l.b16 %v420
        %v869 = vunpack.c.l.b16 %v421
        %v870 = vunpack.c.l.b16 %v422
        %v871 = vunpack.c.l.b16 %v423
        %v872 = vunpack.c.l.b16 %v424
        %v873 = vunpack.c.l.b16 %v425
        %v874 = vunpack.c.l.b16 %v426
        %v875 = vunpack.c.l.b16 %v427
        %v876 = vunpack.c.l.b16 %v428
        %v877 = vunpack.c.l.b16 %v429
        %v878 = vunpack.c.l.b16 %v430
        %v879 = vunpack.c.l.b16 %v431
        %v880 = vunpack.c.l.b16 %v432
        %v881 = vunpack.c.l.b16 %v433
        %v882 = vunpack.c.l.b16 %v434
        %v883 = vunpack.c.l.b16 %v435
        %v884 = vunpack.c.l.b16 %v436
        %v885 = vunpack.c.l.b16 %v437
        %v886 = vunpack.c.l.b16 %v438
        %v887 = vunpack.c.l.b16 %v439
        %v888 = vunpack.c.l.b16 %v440
        %v889 = vunpack.c.l.b16 %v441
        %v890 = vunpack.c.l.b16 %v442
        %v891 = vunpack.c.l.b16 %v443
        %v892 = vunpack.c.l.b16 %v444
        %v893 = vunpack.c.l.b16 %v445
        %v894 = vunpack.c.l.b16 %v446
        %v895 = vunpack.c.l.b16 %v447
        %v896 = vunpack.c.l.b16 %v448
        %v897 = vunpack.c.l.b16 %v449
        %v898 = vunpack.c.l.b16 %v450
        %v899 = vunpack.c.l.b16 %v451
        %v900 = vunpack.c.l.b16 %v452
        %v901 = vunpack.c.l.b16 %v453
        %v902 = vunpack.c.l.b16 %v454
        %v903 = vunpack.c.l.b16 %v455
        %v904 = vpack.c.b16 %v841, %v840
        %v905 = vpack.c.b16 %v843, %v842
        %v906 = vpack.c.b16 %v845, %v844
        %v907 = vpack.c.b16 %v847, %v846
        %v908 = vpack.c.b16 %v849, %v848
        %v909 = vpack.c.b16 %v851, %v850
        %v910 = vpack.c.b16 %v853, %v852
        %v911 = vpack.c.b16 %v855, %v854
        %v912 = vpack.c.b16 %v857, %v856
        %v913 = vpack.c.b16 %v859, %v858
        %v914 = vpack.c.b16 %v861, %v860
        %v915 = vpack.c.b16 %v863, %v862
        %v916 = vpack.c.b16 %v865, %v864
        %v917 = vpack.c.b16 %v867, %v866
        %v918 = vpack.c.b16 %v869, %v868
        %v919 = vpack.c.b16 %v871, %v870
        %v920 = vpack.c.b16 %v873, %v872
        %v921 = vpack.c.b16 %v875, %v874
        %v922 = vpack.c.b16 %v877, %v876
        %v923 = vpack.c.b16 %v879, %v878
        %v924 = vpack.c.b16 %v881, %v880
        %v925 = vpack.c.b16 %v883, %v882
        %v926 = vpack.c.b16 %v885, %v884
        %v927 = vpack.c.b16 %v887, %v886
        %v928 = vpack.c.b16 %v889, %v888
        %v929 = vpack.c.b16 %v891, %v890
        %v930 = vpack.c.b16 %v893, %v892
        %v931 = vpack.c.b16 %v895, %v894
        %v932 = vpack.c.b16 %v897, %v896
        %v933 = vpack.c.b16 %v899, %v898
        %v934 = vpack.c.b16 %v901, %v900
        %v935 = vpack.c.b16 %v903, %v902
        %968 = vmatprep.subr.bf16.mxu0 0
        %969 = vmatpush1.bf16.msra.mxu0 %v904
        %970 = vmatprep.subr.bf16.mxu0 0
        %971 = vmatpush1.bf16.msra.mxu0 %v905
        %972 = vmatprep.subr.bf16.mxu0 0
        %973 = vmatpush1.bf16.msra.mxu0 %v906
        %974 = vmatprep.subr.bf16.mxu0 0
        %975 = vmatpush1.bf16.msra.mxu0 %v907
        %976 = vmatprep.subr.bf16.mxu0 0
        %977 = vmatpush1.bf16.msra.mxu0 %v908
        %978 = vmatprep.subr.bf16.mxu0 0
        %979 = vmatpush1.bf16.msra.mxu0 %v909
        %980 = vmatprep.subr.bf16.mxu0 0
        %981 = vmatpush1.bf16.msra.mxu0 %v910
        %982 = vmatprep.subr.bf16.mxu0 0
        %983 = vmatpush1.bf16.msra.mxu0 %v911
        %984 = vmatprep.subr.bf16.mxu0 0
        %985 = vmatpush1.bf16.msra.mxu0 %v912
        %986 = vmatprep.subr.bf16.mxu0 0
        %987 = vmatpush1.bf16.msra.mxu0 %v913
        %988 = vmatprep.subr.bf16.mxu0 0
        %989 = vmatpush1.bf16.msra.mxu0 %v914
        %990 = vmatprep.subr.bf16.mxu0 0
        %991 = vmatpush1.bf16.msra.mxu0 %v915
        %992 = vmatprep.subr.bf16.mxu0 0
        %993 = vmatpush1.bf16.msra.mxu0 %v916
        %994 = vmatprep.subr.bf16.mxu0 0
        %995 = vmatpush1.bf16.msra.mxu0 %v917
        %996 = vmatprep.subr.bf16.mxu0 0
        %997 = vmatpush1.bf16.msra.mxu0 %v918
        %998 = vmatprep.subr.bf16.mxu0 0
        %999 = vmatpush1.bf16.msra.mxu0 %v919
        %1000 = vmatprep.mubr.bf16.mxu0 %v649
        %1001 = vmatmul.mubr.bf16.gmra.mrb[0].mxu0 %v648
        %v1002 = vpop.f32.mrb[0].mxu0
        %v1003 = vadd.f32 0.0, %v1002
        %v1004 = vpop.f32.mrb[0].mxu0
        %v1005 = vpop.f32.mrb[0].mxu0
        %v1006 = vadd.f32 0.0, %v1005
        %v1007 = vpop.f32.mrb[0].mxu0
        %1008 = vmatprep.mubr.bf16.mxu0 %v653
        %1009 = vmatmul.mubr.bf16.gmra.mrb[0].mxu0 %v652
        %v1010 = vpop.f32.mrb[0].mxu0
        %v1011 = vadd.f32 0.0, %v1010
        %v1012 = vpop.f32.mrb[0].mxu0
        %v1013 = vpop.f32.mrb[0].mxu0
        %v1014 = vadd.f32 0.0, %v1013
        %v1015 = vpop.f32.mrb[0].mxu0
        %1016 = vmatprep.mubr.bf16.mxu0 %v657
        %1017 = vmatmul.mubr.bf16.gmra.mrb[0].mxu0 %v656
        %v1018 = vpop.f32.mrb[0].mxu0
        %v1019 = vadd.f32 0.0, %v1018
        %v1020 = vpop.f32.mrb[0].mxu0
        %v1021 = vpop.f32.mrb[0].mxu0
        %v1022 = vadd.f32 0.0, %v1021
        %v1023 = vpop.f32.mrb[0].mxu0
        %1024 = vmatprep.mubr.bf16.mxu0 %v661
        %1025 = vmatmul.mubr.bf16.gmra.mrb[0].mxu0 %v660
        %v1026 = vpop.f32.mrb[0].mxu0
        %v1027 = vadd.f32 0.0, %v1026
        %v1028 = vpop.f32.mrb[0].mxu0
        %v1029 = vpop.f32.mrb[0].mxu0
        %v1030 = vadd.f32 0.0, %v1029
        %v1031 = vpop.f32.mrb[0].mxu0
        %1032 = vmatprep.mubr.bf16.mxu0 %v665
        %1033 = vmatmul.mubr.bf16.gmra.mrb[0].mxu0 %v664
        %v1034 = vpop.f32.mrb[0].mxu0
        %v1035 = vadd.f32 0.0, %v1034
        %v1036 = vpop.f32.mrb[0].mxu0
        %v1037 = vpop.f32.mrb[0].mxu0
        %v1038 = vadd.f32 0.0, %v1037
        %v1039 = vpop.f32.mrb[0].mxu0
        %1040 = vmatprep.mubr.bf16.mxu0 %v669
        %1041 = vmatmul.mubr.bf16.gmra.mrb[0].mxu0 %v668
        %v1042 = vpop.f32.mrb[0].mxu0
        %v1043 = vadd.f32 0.0, %v1042
        %v1044 = vpop.f32.mrb[0].mxu0
        %v1045 = vpop.f32.mrb[0].mxu0
        %v1046 = vadd.f32 0.0, %v1045
        %v1047 = vpop.f32.mrb[0].mxu0
        %1048 = vmatprep.mubr.bf16.mxu0 %v673
        %1049 = vmatmul.mubr.bf16.gmra.mrb[0].mxu0 %v672
        %v1050 = vpop.f32.mrb[0].mxu0
        %v1051 = vadd.f32 0.0, %v1050
        %v1052 = vpop.f32.mrb[0].mxu0
        %v1053 = vpop.f32.mrb[0].mxu0
        %v1054 = vadd.f32 0.0, %v1053
        %v1055 = vpop.f32.mrb[0].mxu0
        %1056 = vmatprep.mubr.bf16.mxu0 %v677
        %1057 = vmatmul.mubr.bf16.gmra.mrb[0].mxu0 %v676
        %v1058 = vpop.f32.mrb[0].mxu0
        %v1059 = vadd.f32 0.0, %v1058
        %v1060 = vpop.f32.mrb[0].mxu0
        %v1061 = vpop.f32.mrb[0].mxu0
        %v1062 = vadd.f32 0.0, %v1061
        %v1063 = vpop.f32.mrb[0].mxu0
        %1064 = vmatprep.mubr.bf16.mxu0 %v681
        %1065 = vmatmul.mubr.bf16.gmra.mrb[0].mxu0 %v680
        %v1066 = vpop.f32.mrb[0].mxu0
        %v1067 = vadd.f32 0.0, %v1066
        %v1068 = vpop.f32.mrb[0].mxu0
        %v1069 = vpop.f32.mrb[0].mxu0
        %v1070 = vadd.f32 0.0, %v1069
        %v1071 = vpop.f32.mrb[0].mxu0
        %1072 = vmatprep.mubr.bf16.mxu0 %v685
        %1073 = vmatmul.mubr.bf16.gmra.mrb[0].mxu0 %v684
        %v1074 = vpop.f32.mrb[0].mxu0
        %v1075 = vadd.f32 0.0, %v1074
        %v1076 = vpop.f32.mrb[0].mxu0
        %v1077 = vpop.f32.mrb[0].mxu0
        %v1078 = vadd.f32 0.0, %v1077
        %v1079 = vpop.f32.mrb[0].mxu0
        %1080 = vmatprep.mubr.bf16.mxu0 %v689
        %1081 = vmatmul.mubr.bf16.gmra.mrb[0].mxu0 %v688
        %v1082 = vpop.f32.mrb[0].mxu0
        %v1083 = vadd.f32 0.0, %v1082
        %v1084 = vpop.f32.mrb[0].mxu0
        %v1085 = vpop.f32.mrb[0].mxu0
        %v1086 = vadd.f32 0.0, %v1085
        %v1087 = vpop.f32.mrb[0].mxu0
        %1088 = vmatprep.mubr.bf16.mxu0 %v693
        %1089 = vmatmul.mubr.bf16.gmra.mrb[0].mxu0 %v692
        %v1090 = vpop.f32.mrb[0].mxu0
        %v1091 = vadd.f32 0.0, %v1090
        %v1092 = vpop.f32.mrb[0].mxu0
        %v1093 = vpop.f32.mrb[0].mxu0
        %v1094 = vadd.f32 0.0, %v1093
        %v1095 = vpop.f32.mrb[0].mxu0
        %1096 = vmatprep.mubr.bf16.mxu0 %v697
        %1097 = vmatmul.mubr.bf16.gmra.mrb[0].mxu0 %v696
        %v1098 = vpop.f32.mrb[0].mxu0
        %v1099 = vadd.f32 0.0, %v1098
        %v1100 = vpop.f32.mrb[0].mxu0
        %v1101 = vpop.f32.mrb[0].mxu0
        %v1102 = vadd.f32 0.0, %v1101
        %v1103 = vpop.f32.mrb[0].mxu0
        %1104 = vmatprep.mubr.bf16.mxu0 %v701
        %1105 = vmatmul.mubr.bf16.gmra.mrb[0].mxu0 %v700
        %v1106 = vpop.f32.mrb[0].mxu0
        %v1107 = vadd.f32 0.0, %v1106
        %v1108 = vpop.f32.mrb[0].mxu0
        %v1109 = vpop.f32.mrb[0].mxu0
        %v1110 = vadd.f32 0.0, %v1109
        %v1111 = vpop.f32.mrb[0].mxu0
        %1112 = vmatprep.mubr.bf16.mxu0 %v705
        %1113 = vmatmul.mubr.bf16.gmra.mrb[0].mxu0 %v704
        %v1114 = vpop.f32.mrb[0].mxu0
        %v1115 = vadd.f32 0.0, %v1114
        %v1116 = vpop.f32.mrb[0].mxu0
        %v1117 = vpop.f32.mrb[0].mxu0
        %v1118 = vadd.f32 0.0, %v1117
        %v1119 = vpop.f32.mrb[0].mxu0
        %1120 = vmatprep.mubr.bf16.mxu0 %v709
        %1121 = vmatmul.mubr.bf16.gmra.mrb[0].mxu0 %v708
        %v1122 = vpop.f32.mrb[0].mxu0
        %v1123 = vadd.f32 0.0, %v1122
        %v1124 = vpop.f32.mrb[0].mxu0
        %v1125 = vpop.f32.mrb[0].mxu0
        %v1126 = vadd.f32 0.0, %v1125
        %v1127 = vpop.f32.mrb[0].mxu0
        %1128 = vdwg.mxu0
        %1129 = vmatprep.subr.bf16.mxu0 0
        %1130 = vmatpush1.bf16.msra.mxu0 %v920
        %1131 = vmatprep.subr.bf16.mxu0 0
        %1132 = vmatpush1.bf16.msra.mxu0 %v921
        %1133 = vmatprep.subr.bf16.mxu0 0
        %1134 = vmatpush1.bf16.msra.mxu0 %v922
        %1135 = vmatprep.subr.bf16.mxu0 0
        %1136 = vmatpush1.bf16.msra.mxu0 %v923
        %1137 = vmatprep.subr.bf16.mxu0 0
        %1138 = vmatpush1.bf16.msra.mxu0 %v924
        %1139 = vmatprep.subr.bf16.mxu0 0
        %1140 = vmatpush1.bf16.msra.mxu0 %v925
        %1141 = vmatprep.subr.bf16.mxu0 0
        %1142 = vmatpush1.bf16.msra.mxu0 %v926
        %1143 = vmatprep.subr.bf16.mxu0 0
        %1144 = vmatpush1.bf16.msra.mxu0 %v927
        %1145 = vmatprep.subr.bf16.mxu0 0
        %1146 = vmatpush1.bf16.msra.mxu0 %v928
        %1147 = vmatprep.subr.bf16.mxu0 0
        %1148 = vmatpush1.bf16.msra.mxu0 %v929
        %1149 = vmatprep.subr.bf16.mxu0 0
        %1150 = vmatpush1.bf16.msra.mxu0 %v930
        %1151 = vmatprep.subr.bf16.mxu0 0
        %1152 = vmatpush1.bf16.msra.mxu0 %v931
        %1153 = vmatprep.subr.bf16.mxu0 0
        %1154 = vmatpush1.bf16.msra.mxu0 %v932
        %1155 = vmatprep.subr.bf16.mxu0 0
        %1156 = vmatpush1.bf16.msra.mxu0 %v933
        %1157 = vmatprep.subr.bf16.mxu0 0
        %1158 = vmatpush1.bf16.msra.mxu0 %v934
        %1159 = vmatprep.subr.bf16.mxu0 0
        %1160 = vmatpush1.bf16.msra.mxu0 %v935
        %1161 = vmatprep.mubr.bf16.mxu0 %v651
        %1162 = vmatmul.mubr.bf16.gmra.mrb[0].mxu0 %v650
        %v1163 = vpop.f32.mrb[0].mxu0
        %v1164 = vadd.f32 %v1003, %v1163
        %v1165 = vpop.f32.mrb[0].mxu0
        %v1166 = vpop.f32.mrb[0].mxu0
        %v1167 = vadd.f32 %v1006, %v1166
        %v1168 = vpop.f32.mrb[0].mxu0
        %1169 = vmatprep.mubr.bf16.mxu0 %v655
        %1170 = vmatmul.mubr.bf16.gmra.mrb[0].mxu0 %v654
        %v1171 = vpop.f32.mrb[0].mxu0
        %v1172 = vadd.f32 %v1011, %v1171
        %v1173 = vpop.f32.mrb[0].mxu0
        %v1174 = vpop.f32.mrb[0].mxu0
        %v1175 = vadd.f32 %v1014, %v1174
        %v1176 = vpop.f32.mrb[0].mxu0
        %1177 = vmatprep.mubr.bf16.mxu0 %v659
        %1178 = vmatmul.mubr.bf16.gmra.mrb[0].mxu0 %v658
        %v1179 = vpop.f32.mrb[0].mxu0
        %v1180 = vadd.f32 %v1019, %v1179
        %v1181 = vpop.f32.mrb[0].mxu0
        %v1182 = vpop.f32.mrb[0].mxu0
        %v1183 = vadd.f32 %v1022, %v1182
        %v1184 = vpop.f32.mrb[0].mxu0
        %1185 = vmatprep.mubr.bf16.mxu0 %v663
        %1186 = vmatmul.mubr.bf16.gmra.mrb[0].mxu0 %v662
        %v1187 = vpop.f32.mrb[0].mxu0
        %v1188 = vadd.f32 %v1027, %v1187
        %v1189 = vpop.f32.mrb[0].mxu0
        %v1190 = vpop.f32.mrb[0].mxu0
        %v1191 = vadd.f32 %v1030, %v1190
        %v1192 = vpop.f32.mrb[0].mxu0
        %1193 = vmatprep.mubr.bf16.mxu0 %v667
        %1194 = vmatmul.mubr.bf16.gmra.mrb[0].mxu0 %v666
        %v1195 = vpop.f32.mrb[0].mxu0
        %v1196 = vadd.f32 %v1035, %v1195
        %v1197 = vpop.f32.mrb[0].mxu0
        %v1198 = vpop.f32.mrb[0].mxu0
        %v1199 = vadd.f32 %v1038, %v1198
        %v1200 = vpop.f32.mrb[0].mxu0
        %1201 = vmatprep.mubr.bf16.mxu0 %v671
        %1202 = vmatmul.mubr.bf16.gmra.mrb[0].mxu0 %v670
        %v1203 = vpop.f32.mrb[0].mxu0
        %v1204 = vadd.f32 %v1043, %v1203
        %v1205 = vpop.f32.mrb[0].mxu0
        %v1206 = vpop.f32.mrb[0].mxu0
        %v1207 = vadd.f32 %v1046, %v1206
        %v1208 = vpop.f32.mrb[0].mxu0
        %1209 = vmatprep.mubr.bf16.mxu0 %v675
        %1210 = vmatmul.mubr.bf16.gmra.mrb[0].mxu0 %v674
        %v1211 = vpop.f32.mrb[0].mxu0
        %v1212 = vadd.f32 %v1051, %v1211
        %v1213 = vpop.f32.mrb[0].mxu0
        %v1214 = vpop.f32.mrb[0].mxu0
        %v1215 = vadd.f32 %v1054, %v1214
        %v1216 = vpop.f32.mrb[0].mxu0
        %1217 = vmatprep.mubr.bf16.mxu0 %v679
        %1218 = vmatmul.mubr.bf16.gmra.mrb[0].mxu0 %v678
        %v1219 = vpop.f32.mrb[0].mxu0
        %v1220 = vadd.f32 %v1059, %v1219
        %v1221 = vpop.f32.mrb[0].mxu0
        %v1222 = vpop.f32.mrb[0].mxu0
        %v1223 = vadd.f32 %v1062, %v1222
        %v1224 = vpop.f32.mrb[0].mxu0
        %1225 = vmatprep.mubr.bf16.mxu0 %v683
        %1226 = vmatmul.mubr.bf16.gmra.mrb[0].mxu0 %v682
        %v1227 = vpop.f32.mrb[0].mxu0
        %v1228 = vadd.f32 %v1067, %v1227
        %v1229 = vpop.f32.mrb[0].mxu0
        %v1230 = vpop.f32.mrb[0].mxu0
        %v1231 = vadd.f32 %v1070, %v1230
        %v1232 = vpop.f32.mrb[0].mxu0
        %1233 = vmatprep.mubr.bf16.mxu0 %v687
        %1234 = vmatmul.mubr.bf16.gmra.mrb[0].mxu0 %v686
        %v1235 = vpop.f32.mrb[0].mxu0
        %v1236 = vadd.f32 %v1075, %v1235
        %v1237 = vpop.f32.mrb[0].mxu0
        %v1238 = vpop.f32.mrb[0].mxu0
        %v1239 = vadd.f32 %v1078, %v1238
        %v1240 = vpop.f32.mrb[0].mxu0
        %1241 = vmatprep.mubr.bf16.mxu0 %v691
        %1242 = vmatmul.mubr.bf16.gmra.mrb[0].mxu0 %v690
        %v1243 = vpop.f32.mrb[0].mxu0
        %v1244 = vadd.f32 %v1083, %v1243
        %v1245 = vpop.f32.mrb[0].mxu0
        %v1246 = vpop.f32.mrb[0].mxu0
        %v1247 = vadd.f32 %v1086, %v1246
        %v1248 = vpop.f32.mrb[0].mxu0
        %1249 = vmatprep.mubr.bf16.mxu0 %v695
        %1250 = vmatmul.mubr.bf16.gmra.mrb[0].mxu0 %v694
        %v1251 = vpop.f32.mrb[0].mxu0
        %v1252 = vadd.f32 %v1091, %v1251
        %v1253 = vpop.f32.mrb[0].mxu0
        %v1254 = vpop.f32.mrb[0].mxu0
        %v1255 = vadd.f32 %v1094, %v1254
        %v1256 = vpop.f32.mrb[0].mxu0
        %1257 = vmatprep.mubr.bf16.mxu0 %v699
        %1258 = vmatmul.mubr.bf16.gmra.mrb[0].mxu0 %v698
        %v1259 = vpop.f32.mrb[0].mxu0
        %v1260 = vadd.f32 %v1099, %v1259
        %v1261 = vpop.f32.mrb[0].mxu0
        %v1262 = vpop.f32.mrb[0].mxu0
        %v1263 = vadd.f32 %v1102, %v1262
        %v1264 = vpop.f32.mrb[0].mxu0
        %1265 = vmatprep.mubr.bf16.mxu0 %v703
        %1266 = vmatmul.mubr.bf16.gmra.mrb[0].mxu0 %v702
        %v1267 = vpop.f32.mrb[0].mxu0
        %v1268 = vadd.f32 %v1107, %v1267
        %v1269 = vpop.f32.mrb[0].mxu0
        %v1270 = vpop.f32.mrb[0].mxu0
        %v1271 = vadd.f32 %v1110, %v1270
        %v1272 = vpop.f32.mrb[0].mxu0
        %1273 = vmatprep.mubr.bf16.mxu0 %v707
        %1274 = vmatmul.mubr.bf16.gmra.mrb[0].mxu0 %v706
        %v1275 = vpop.f32.mrb[0].mxu0
        %v1276 = vadd.f32 %v1115, %v1275
        %v1277 = vpop.f32.mrb[0].mxu0
        %v1278 = vpop.f32.mrb[0].mxu0
        %v1279 = vadd.f32 %v1118, %v1278
        %v1280 = vpop.f32.mrb[0].mxu0
        %1281 = vmatprep.mubr.bf16.mxu0 %v711
        %1282 = vmatmul.mubr.bf16.gmra.mrb[0].mxu0 %v710
        %v1283 = vpop.f32.mrb[0].mxu0
        %v1284 = vadd.f32 %v1123, %v1283
        %v1285 = vpop.f32.mrb[0].mxu0
        %v1286 = vpop.f32.mrb[0].mxu0
        %v1287 = vadd.f32 %v1126, %v1286
        %v1288 = vpop.f32.mrb[0].mxu0
        %1289 = vdwg.mxu0
        %v1290 = vadd.f32 %v296, %v1164
        %v1291 = vadd.f32 %v297, %v1167
        %v1292 = vadd.f32 %v298, %v1172
        %v1293 = vadd.f32 %v299, %v1175
        %v1294 = vadd.f32 %v300, %v1180
        %v1295 = vadd.f32 %v301, %v1183
        %v1296 = vadd.f32 %v302, %v1188
        %v1297 = vadd.f32 %v303, %v1191
        %v1298 = vadd.f32 %v304, %v1196
        %v1299 = vadd.f32 %v305, %v1199
        %v1300 = vadd.f32 %v306, %v1204
        %v1301 = vadd.f32 %v307, %v1207
        %v1302 = vadd.f32 %v308, %v1212
        %v1303 = vadd.f32 %v309, %v1215
        %v1304 = vadd.f32 %v310, %v1220
        %v1305 = vadd.f32 %v311, %v1223
        %v1306 = vadd.f32 %v312, %v1228
        %v1307 = vadd.f32 %v313, %v1231
        %v1308 = vadd.f32 %v314, %v1236
        %v1309 = vadd.f32 %v315, %v1239
        %v1310 = vadd.f32 %v316, %v1244
        %v1311 = vadd.f32 %v317, %v1247
        %v1312 = vadd.f32 %v318, %v1252
        %v1313 = vadd.f32 %v319, %v1255
        %v1314 = vadd.f32 %v320, %v1260
        %v1315 = vadd.f32 %v321, %v1263
        %v1316 = vadd.f32 %v322, %v1268
        %v1317 = vadd.f32 %v323, %v1271
        %v1318 = vadd.f32 %v324, %v1276
        %v1319 = vadd.f32 %v325, %v1279
        %v1320 = vadd.f32 %v326, %v1284
        %v1321 = vadd.f32 %v327, %v1287
        %1322 = vst [vmem:[#allocation2] sm:$0xff] %v1290
        %1323 = vst [vmem:[#allocation2 + $0x8] sm:$0xff] %v1291
        %1324 = vst [vmem:[#allocation2 + $0x10] sm:$0xff] %v1292
        %1325 = vst [vmem:[#allocation2 + $0x18] sm:$0xff] %v1293
        %1326 = vst [vmem:[#allocation2 + $0x20] sm:$0xff] %v1294
        %1327 = vst [vmem:[#allocation2 + $0x28] sm:$0xff] %v1295
        %1328 = vst [vmem:[#allocation2 + $0x30] sm:$0xff] %v1296
        %1329 = vst [vmem:[#allocation2 + $0x38] sm:$0xff] %v1297
        %1330 = vst [vmem:[#allocation2 + $0x40] sm:$0xff] %v1298
        %1331 = vst [vmem:[#allocation2 + $0x48] sm:$0xff] %v1299
        %1332 = vst [vmem:[#allocation2 + $0x50] sm:$0xff] %v1300
        %1333 = vst [vmem:[#allocation2 + $0x58] sm:$0xff] %v1301
        %1334 = vst [vmem:[#allocation2 + $0x60] sm:$0xff] %v1302
        %1335 = vst [vmem:[#allocation2 + $0x68] sm:$0xff] %v1303
        %1336 = vst [vmem:[#allocation2 + $0x70] sm:$0xff] %v1304
        %1337 = vst [vmem:[#allocation2 + $0x78] sm:$0xff] %v1305
        %1338 = vst [vmem:[#allocation2 + $0x80] sm:$0xff] %v1306
        %1339 = vst [vmem:[#allocation2 + $0x88] sm:$0xff] %v1307
        %1340 = vst [vmem:[#allocation2 + $0x90] sm:$0xff] %v1308
        %1341 = vst [vmem:[#allocation2 + $0x98] sm:$0xff] %v1309
        %1342 = vst [vmem:[#allocation2 + $0xa0] sm:$0xff] %v1310
        %1343 = vst [vmem:[#allocation2 + $0xa8] sm:$0xff] %v1311
        %1344 = vst [vmem:[#allocation2 + $0xb0] sm:$0xff] %v1312
        %1345 = vst [vmem:[#allocation2 + $0xb8] sm:$0xff] %v1313
        %1346 = vst [vmem:[#allocation2 + $0xc0] sm:$0xff] %v1314
        %1347 = vst [vmem:[#allocation2 + $0xc8] sm:$0xff] %v1315
        %1348 = vst [vmem:[#allocation2 + $0xd0] sm:$0xff] %v1316
        %1349 = vst [vmem:[#allocation2 + $0xd8] sm:$0xff] %v1317
        %1350 = vst [vmem:[#allocation2 + $0xe0] sm:$0xff] %v1318
        %1351 = vst [vmem:[#allocation2 + $0xe8] sm:$0xff] %v1319
        %1352 = vst [vmem:[#allocation2 + $0xf0] sm:$0xff] %v1320
        %1353 = vst [vmem:[#allocation2 + $0xf8] sm:$0xff] %v1321
        // Predicated region
        $region45: #{tpu_custom_call.1} parent=31 // pred_check
          %p1354 = pneg %p260
        $region46: #{tpu_custom_call.1} parent=31 // pred_check_branch
          %1356 = sbr.rel (%p1354) target = $region48
        $region47: #{tpu_custom_call.1} parent=31 // pred_region
          %v1357 = vld [vmem:[#allocation2] sm:$0xff]
          %v1358 = vld [vmem:[#allocation2 + $0x8] sm:$0xff]
          %v1359 = vld [vmem:[#allocation2 + $0x10] sm:$0xff]
          %v1360 = vld [vmem:[#allocation2 + $0x18] sm:$0xff]
          %v1361 = vld [vmem:[#allocation2 + $0x20] sm:$0xff]
          %v1362 = vld [vmem:[#allocation2 + $0x28] sm:$0xff]
          %v1363 = vld [vmem:[#allocation2 + $0x30] sm:$0xff]
          %v1364 = vld [vmem:[#allocation2 + $0x38] sm:$0xff]
          %v1365 = vld [vmem:[#allocation2 + $0x40] sm:$0xff]
          %v1366 = vld [vmem:[#allocation2 + $0x48] sm:$0xff]
          %v1367 = vld [vmem:[#allocation2 + $0x50] sm:$0xff]
          %v1368 = vld [vmem:[#allocation2 + $0x58] sm:$0xff]
          %v1369 = vld [vmem:[#allocation2 + $0x60] sm:$0xff]
          %v1370 = vld [vmem:[#allocation2 + $0x68] sm:$0xff]
          %v1371 = vld [vmem:[#allocation2 + $0x70] sm:$0xff]
          %v1372 = vld [vmem:[#allocation2 + $0x78] sm:$0xff]
          %v1373 = vld [vmem:[#allocation2 + $0x80] sm:$0xff]
          %v1374 = vld [vmem:[#allocation2 + $0x88] sm:$0xff]
          %v1375 = vld [vmem:[#allocation2 + $0x90] sm:$0xff]
          %v1376 = vld [vmem:[#allocation2 + $0x98] sm:$0xff]
          %v1377 = vld [vmem:[#allocation2 + $0xa0] sm:$0xff]
          %v1378 = vld [vmem:[#allocation2 + $0xa8] sm:$0xff]
          %v1379 = vld [vmem:[#allocation2 + $0xb0] sm:$0xff]
          %v1380 = vld [vmem:[#allocation2 + $0xb8] sm:$0xff]
          %v1381 = vld [vmem:[#allocation2 + $0xc0] sm:$0xff]
          %v1382 = vld [vmem:[#allocation2 + $0xc8] sm:$0xff]
          %v1383 = vld [vmem:[#allocation2 + $0xd0] sm:$0xff]
          %v1384 = vld [vmem:[#allocation2 + $0xd8] sm:$0xff]
          %v1385 = vld [vmem:[#allocation2 + $0xe0] sm:$0xff]
          %v1386 = vld [vmem:[#allocation2 + $0xe8] sm:$0xff]
          %v1387 = vld [vmem:[#allocation2 + $0xf0] sm:$0xff]
          %v1388 = vld [vmem:[#allocation2 + $0xf8] sm:$0xff]
          %v1389 = vld [vmem:[%s257] sm:$0x1]
          %v1391 = vlaneseq
          %v1392 = vshrl.u32 %v1391, 7
          %v1393 = vsub.s32 0, %v1392
          %v1394 = vrot.slane %v1389, %v1393
          %v1396 = vadd.f32 %v1357, %v1394
          %v1397 = vadd.f32 %v1358, %v1394
          %v1398 = vadd.f32 %v1359, %v1394
          %v1399 = vadd.f32 %v1360, %v1394
          %v1400 = vadd.f32 %v1361, %v1394
          %v1401 = vadd.f32 %v1362, %v1394
          %v1402 = vadd.f32 %v1363, %v1394
          %v1403 = vadd.f32 %v1364, %v1394
          %v1404 = vadd.f32 %v1365, %v1394
          %v1405 = vadd.f32 %v1366, %v1394
          %v1406 = vadd.f32 %v1367, %v1394
          %v1407 = vadd.f32 %v1368, %v1394
          %v1408 = vadd.f32 %v1369, %v1394
          %v1409 = vadd.f32 %v1370, %v1394
          %v1410 = vadd.f32 %v1371, %v1394
          %v1411 = vadd.f32 %v1372, %v1394
          %v1412 = vadd.f32 %v1373, %v1394
          %v1413 = vadd.f32 %v1374, %v1394
          %v1414 = vadd.f32 %v1375, %v1394
          %v1415 = vadd.f32 %v1376, %v1394
          %v1416 = vadd.f32 %v1377, %v1394
          %v1417 = vadd.f32 %v1378, %v1394
          %v1418 = vadd.f32 %v1379, %v1394
          %v1419 = vadd.f32 %v1380, %v1394
          %v1420 = vadd.f32 %v1381, %v1394
          %v1421 = vadd.f32 %v1382, %v1394
          %v1422 = vadd.f32 %v1383, %v1394
          %v1423 = vadd.f32 %v1384, %v1394
          %v1424 = vadd.f32 %v1385, %v1394
          %v1425 = vadd.f32 %v1386, %v1394
          %v1426 = vadd.f32 %v1387, %v1394
          %v1427 = vadd.f32 %v1388, %v1394
          %v1428 = vmax.f32 %v1396, 0.0
          %v1429 = vmax.f32 %v1397, 0.0
          %v1430 = vmax.f32 %v1398, 0.0
          %v1431 = vmax.f32 %v1399, 0.0
          %v1432 = vmax.f32 %v1400, 0.0
          %v1433 = vmax.f32 %v1401, 0.0
          %v1434 = vmax.f32 %v1402, 0.0
          %v1435 = vmax.f32 %v1403, 0.0
          %v1436 = vmax.f32 %v1404, 0.0
          %v1437 = vmax.f32 %v1405, 0.0
          %v1438 = vmax.f32 %v1406, 0.0
          %v1439 = vmax.f32 %v1407, 0.0
          %v1440 = vmax.f32 %v1408, 0.0
          %v1441 = vmax.f32 %v1409, 0.0
          %v1442 = vmax.f32 %v1410, 0.0
          %v1443 = vmax.f32 %v1411, 0.0
          %v1444 = vmax.f32 %v1412, 0.0
          %v1445 = vmax.f32 %v1413, 0.0
          %v1446 = vmax.f32 %v1414, 0.0
          %v1447 = vmax.f32 %v1415, 0.0
          %v1448 = vmax.f32 %v1416, 0.0
          %v1449 = vmax.f32 %v1417, 0.0
          %v1450 = vmax.f32 %v1418, 0.0
          %v1451 = vmax.f32 %v1419, 0.0
          %v1452 = vmax.f32 %v1420, 0.0
          %v1453 = vmax.f32 %v1421, 0.0
          %v1454 = vmax.f32 %v1422, 0.0
          %v1455 = vmax.f32 %v1423, 0.0
          %v1456 = vmax.f32 %v1424, 0.0
          %v1457 = vmax.f32 %v1425, 0.0
          %v1458 = vmax.f32 %v1426, 0.0
          %v1459 = vmax.f32 %v1427, 0.0
          %v1460 = vpack.c.bf16 %v1429, %v1428
          %v1461 = vpack.c.bf16 %v1431, %v1430
          %v1462 = vpack.c.bf16 %v1433, %v1432
          %v1463 = vpack.c.bf16 %v1435, %v1434
          %v1464 = vpack.c.bf16 %v1437, %v1436
          %v1465 = vpack.c.bf16 %v1439, %v1438
          %v1466 = vpack.c.bf16 %v1441, %v1440
          %v1467 = vpack.c.bf16 %v1443, %v1442
          %v1468 = vpack.c.bf16 %v1445, %v1444
          %v1469 = vpack.c.bf16 %v1447, %v1446
          %v1470 = vpack.c.bf16 %v1449, %v1448
          %v1471 = vpack.c.bf16 %v1451, %v1450
          %v1472 = vpack.c.bf16 %v1453, %v1452
          %v1473 = vpack.c.bf16 %v1455, %v1454
          %v1474 = vpack.c.bf16 %v1457, %v1456
          %v1475 = vpack.c.bf16 %v1459, %v1458
          %v1492 = vunpack.c.l.b16 %v1460
          %v1493 = vunpack.c.h.b16 %v1460
          %v1494 = vunpack.c.l.b16 %v1461
          %v1495 = vunpack.c.h.b16 %v1461
          %v1496 = vunpack.c.l.b16 %v1462
          %v1497 = vunpack.c.h.b16 %v1462
          %v1498 = vunpack.c.l.b16 %v1463
          %v1499 = vunpack.c.h.b16 %v1463
          %v1500 = vunpack.c.l.b16 %v1464
          %v1501 = vunpack.c.h.b16 %v1464
          %v1502 = vunpack.c.l.b16 %v1465
          %v1503 = vunpack.c.h.b16 %v1465
          %v1504 = vunpack.c.l.b16 %v1466
          %v1505 = vunpack.c.h.b16 %v1466
          %v1506 = vunpack.c.l.b16 %v1467
          %v1507 = vunpack.c.h.b16 %v1467
          %v1508 = vunpack.c.l.b16 %v1468
          %v1509 = vunpack.c.h.b16 %v1468
          %v1510 = vunpack.c.l.b16 %v1469
          %v1511 = vunpack.c.h.b16 %v1469
          %v1512 = vunpack.c.l.b16 %v1470
          %v1513 = vunpack.c.h.b16 %v1470
          %v1514 = vunpack.c.l.b16 %v1471
          %v1515 = vunpack.c.h.b16 %v1471
          %v1516 = vunpack.c.l.b16 %v1472
          %v1517 = vunpack.c.h.b16 %v1472
          %v1518 = vunpack.c.l.b16 %v1473
          %v1519 = vunpack.c.h.b16 %v1473
          %v1520 = vunpack.c.l.b16 %v1474
          %v1521 = vunpack.c.h.b16 %v1474
          %v1522 = vunpack.c.l.b16 %v1475
          %v1523 = vunpack.c.h.b16 %v1475
          %v1524 = vpack.c.b16 %v1492, %v1492
          %v1525 = vpack.c.b16 %v1493, %v1493
          %v1526 = vpack.c.b16 %v1494, %v1494
          %v1527 = vpack.c.b16 %v1495, %v1495
          %v1528 = vpack.c.b16 %v1496, %v1496
          %v1529 = vpack.c.b16 %v1497, %v1497
          %v1530 = vpack.c.b16 %v1498, %v1498
          %v1531 = vpack.c.b16 %v1499, %v1499
          %v1532 = vpack.c.b16 %v1500, %v1500
          %v1533 = vpack.c.b16 %v1501, %v1501
          %v1534 = vpack.c.b16 %v1502, %v1502
          %v1535 = vpack.c.b16 %v1503, %v1503
          %v1536 = vpack.c.b16 %v1504, %v1504
          %v1537 = vpack.c.b16 %v1505, %v1505
          %v1538 = vpack.c.b16 %v1506, %v1506
          %v1539 = vpack.c.b16 %v1507, %v1507
          %v1540 = vpack.c.b16 %v1508, %v1508
          %v1541 = vpack.c.b16 %v1509, %v1509
          %v1542 = vpack.c.b16 %v1510, %v1510
          %v1543 = vpack.c.b16 %v1511, %v1511
          %v1544 = vpack.c.b16 %v1512, %v1512
          %v1545 = vpack.c.b16 %v1513, %v1513
          %v1546 = vpack.c.b16 %v1514, %v1514
          %v1547 = vpack.c.b16 %v1515, %v1515
          %v1548 = vpack.c.b16 %v1516, %v1516
          %v1549 = vpack.c.b16 %v1517, %v1517
          %v1550 = vpack.c.b16 %v1518, %v1518
          %v1551 = vpack.c.b16 %v1519, %v1519
          %v1552 = vpack.c.b16 %v1520, %v1520
          %v1553 = vpack.c.b16 %v1521, %v1521
          %v1554 = vpack.c.b16 %v1522, %v1522
          %v1555 = vpack.c.b16 %v1523, %v1523
          %1588 = vst [vmem:[%s251] sm:$0xf] %v1524
          %1589 = vst [vmem:[%s251 + $0x4] sm:$0xf] %v1525
          %1590 = vst [vmem:[%s251 + $0x8] sm:$0xf] %v1526
          %1591 = vst [vmem:[%s251 + $0xc] sm:$0xf] %v1527
          %1592 = vst [vmem:[%s251 + $0x10] sm:$0xf] %v1528
          %1593 = vst [vmem:[%s251 + $0x14] sm:$0xf] %v1529
          %1594 = vst [vmem:[%s251 + $0x18] sm:$0xf] %v1530
          %1595 = vst [vmem:[%s251 + $0x1c] sm:$0xf] %v1531
          %1596 = vst [vmem:[%s251 + $0x20] sm:$0xf] %v1532
          %1597 = vst [vmem:[%s251 + $0x24] sm:$0xf] %v1533
          %1598 = vst [vmem:[%s251 + $0x28] sm:$0xf] %v1534
          %1599 = vst [vmem:[%s251 + $0x2c] sm:$0xf] %v1535
          %1600 = vst [vmem:[%s251 + $0x30] sm:$0xf] %v1536
          %1601 = vst [vmem:[%s251 + $0x34] sm:$0xf] %v1537
          %1602 = vst [vmem:[%s251 + $0x38] sm:$0xf] %v1538
          %1603 = vst [vmem:[%s251 + $0x3c] sm:$0xf] %v1539
          %1604 = vst [vmem:[%s251 + $0x40] sm:$0xf] %v1540
          %1605 = vst [vmem:[%s251 + $0x44] sm:$0xf] %v1541
          %1606 = vst [vmem:[%s251 + $0x48] sm:$0xf] %v1542
          %1607 = vst [vmem:[%s251 + $0x4c] sm:$0xf] %v1543
          %1608 = vst [vmem:[%s251 + $0x50] sm:$0xf] %v1544
          %1609 = vst [vmem:[%s251 + $0x54] sm:$0xf] %v1545
          %1610 = vst [vmem:[%s251 + $0x58] sm:$0xf] %v1546
          %1611 = vst [vmem:[%s251 + $0x5c] sm:$0xf] %v1547
          %1612 = vst [vmem:[%s251 + $0x60] sm:$0xf] %v1548
          %1613 = vst [vmem:[%s251 + $0x64] sm:$0xf] %v1549
          %1614 = vst [vmem:[%s251 + $0x68] sm:$0xf] %v1550
          %1615 = vst [vmem:[%s251 + $0x6c] sm:$0xf] %v1551
          %1616 = vst [vmem:[%s251 + $0x70] sm:$0xf] %v1552
          %1617 = vst [vmem:[%s251 + $0x74] sm:$0xf] %v1553
          %1618 = vst [vmem:[%s251 + $0x78] sm:$0xf] %v1554
          %1619 = vst [vmem:[%s251 + $0x7c] sm:$0xf] %v1555
        $region48: #{tpu_custom_call.1} parent=31 // pred_fallthru
          _
        %s1620 = sand.u32 %s132, 1
        %s1621 = scalar_lea.sflag [#allocation5], %s1620
        %s1622 = sand.u32 %s132, 1
        %s1623 = smul.addr %s1622, 128
        %s1624 = scalar_lea.vmem [#allocation8], %s1623
        // Predicated region
        $region49: #{tpu_custom_call.1} parent=31 // pred_check
          %p1625 = pneg %p142
        $region50: #{tpu_custom_call.1} parent=31 // pred_check_branch
          %1627 = sbr.rel (%p1625) target = $region52
        $region51: #{tpu_custom_call.1} parent=31 // pred_region
          %s1628 = smul.u32 32, %s26
          %s1630 = ssub.s32 2048, 2048
          %1631 = vsyncadd %s1621, %s1630
          %s1632 = sadd.s32 %s27, %s1628
          %s1633 = smul.addr %s1632, 64
          %s1634 = scalar_lea.hbm %s3, %s1633
          %s1635 = sshll.u32 %s1624, 4
          %s1636 = int_to_ptr.vmem [resolvable:$true] %s1635
          %1641 = dma.vmem_to_hbm [thread:$0]  %s1636, 2048, %s1634, %s1621, 64, 64, 4
        $region52: #{tpu_custom_call.1} parent=31 // pred_fallthru
          _
      $region32: #{tpu_custom_call.1} parent=5 // pred_fallthru
        _
      %p1642 = scmp.le.s32.totalorder 2, %s16
      // Predicated region
      $region53: #{tpu_custom_call.1} parent=5 // pred_check
        %p1643 = pneg %p1642
      $region54: #{tpu_custom_call.1} parent=5 // pred_check_branch
        %1645 = sbr.rel (%p1643) target = $region56
      $region55: #{tpu_custom_call.1} parent=5 // pred_region
        %s1646 = ssub.s32 %s16, 2
        // Predicated region
        $region57: #{tpu_custom_call.1} parent=55 // pred_check
          %p1647 = pneg %p148
        $region58: #{tpu_custom_call.1} parent=55 // pred_check_branch
          %1649 = sbr.rel (%p1647) target = $region60
        $region59: #{tpu_custom_call.1} parent=55 // pred_region
          %s1650 = sand.u32 %s133, 1
          %s1651 = scalar_lea.sflag [#allocation5], %s1650
          %s1652 = sand.u32 %s133, 1
          %s1653 = smul.addr %s1652, 128
          %s1654 = scalar_lea.vmem [#allocation8], %s1653
          %1655 = dma.done %s1651, 2048
        $region60: #{tpu_custom_call.1} parent=55 // pred_fallthru
          _
      $region56: #{tpu_custom_call.1} parent=5 // pred_fallthru
        _
    $region6: #{tpu_custom_call.1} parent=1 // loop_footer
      %s20 = sadd.s32 1, %s16
    $region7: #{tpu_custom_call.1} parent=1 // loop_footer_branch
      %15 = sbr.rel target = $region3
    $region8: #{tpu_custom_call.1} parent=1 // loop_exit
      _
    %1656 = vsyncpa [#allocation4], 1
    %s1657 = scalar_lea.sflag [#allocation4], 1
    %1658 = vsyncpa %s1657, 1
    %1659 = vsyncpa [#allocation7], 1
    %1660 = vsyncpa [#allocation5], 1
    %s1661 = scalar_lea.sflag [#allocation5], 1
    %1662 = vsyncpa %s1661, 1

</llo_original>
